<compile_context>
chip_gen: v7x
topology: tpu7x:2x2x1
jax: 0.10.0
libtpu: 0.0.40
codegen_flags: <defaults>
</compile_context>

<pallas_src>
import jax
import jax.numpy as jnp
import numpy as np
from jax import lax
from jax.experimental import pallas as pl
from jax.experimental.pallas import tpu as pltpu


def lstm_mlp_kernel(x_ref, h0_ref, c0_ref, w_rec_ref, w_mlp_ref, b_ref,
                    out_ref, hN_ref, cN_ref, gates_ref):
    """Full LSTM recurrence + last-step MLP head, all resident in VMEM.

    x_ref      : (T*Bp, D)  bf16, time-major-flattened, batch padded to Bp
    h0/c0_ref  : (Bp, Hp)   f32, hidden padded to Hp (padded lanes are zero)
    w_rec_ref  : (D+Hp, 4Hp) bf16, rows [0:D]=W_ih^T, rows [D:]=W_hh^T,
                 gate columns in (i, f, o, g) order, each block Hp wide
    w_mlp_ref  : (Hp, Hhp+Op) bf16, cols [0:Hhp]=W1^T, cols [Hhp:]=W2^T
                 (packing assumes Hp == Hhp after padding, both 128 here)
    b_ref      : (1, 4Hp+Hhp+Op) f32 = [gate bias | b1 | b2]
    gates_ref  : (T*Bp, 4Hp) f32 VMEM scratch for the hoisted input projection
    """
    Bp, Hp = h0_ref.shape
    T = x_ref.shape[0] // Bp
    D = x_ref.shape[1]
    G = 4 * Hp
    Op = out_ref.shape[1]
    Hhp = w_mlp_ref.shape[1] - Op

    # ---- hoisted: input projection for ALL timesteps in one bf16 MXU matmul,
    #      stored to tile-aligned VMEM scratch (not kept live in vregs). ----
    b_gates = b_ref[:, :G]                                           # (1, 4Hp)
    gates_ref[...] = (jnp.dot(x_ref[...], w_rec_ref[:D, :],
                              preferred_element_type=jnp.float32)
                      + b_gates)                                     # (T*Bp, 4Hp) f32

    # ---- hoisted: recurrent weight (bf16) stays resident across steps ----
    w_hh = w_rec_ref[D:, :]                                          # (Hp, 4Hp)

    h = h0_ref[...]                                                  # (Bp, Hp) f32
    c = c0_ref[...]

    # ---- fully unrolled recurrence (T is a small compile-time constant) ----
    # TODO(synk): for T >~ 16 switch to lax.fori_loop(..., unroll=4..8) reading
    #             per-step gates from gates_ref to bound vreg live ranges.
    for t in range(T):
        g_pre = (gates_ref[t * Bp:(t + 1) * Bp, :]                   # aligned load
                 + jnp.dot(h.astype(jnp.bfloat16), w_hh,
                           preferred_element_type=jnp.float32))      # (Bp, 4Hp) f32
        # gate blocks (i, f, o, g) each occupy a full 128-lane vreg:
        # one sigmoid over 3*Hp lanes + one tanh over Hp lanes, no relayout.
        sig = jax.nn.sigmoid(g_pre[:, :3 * Hp])
        i = sig[:, 0 * Hp:1 * Hp]
        f = sig[:, 1 * Hp:2 * Hp]
        o = sig[:, 2 * Hp:3 * Hp]
        g = jnp.tanh(g_pre[:, 3 * Hp:])
        c = f * c + i * g              # f32 elementwise (no bf16 VPU on v5e)
        h = o * jnp.tanh(c)

    hN_ref[...] = h
    cN_ref[...] = c

    # inputs[:, -1, :] -> dropout (identity, eval) -> linear1 -> relu
    #                   -> dropout (identity, eval) -> linear2
    w1 = w_mlp_ref[:, :Hhp]
    w2 = w_mlp_ref[:, Hhp:]
    b1 = b_ref[:, G:G + Hhp]
    b2 = b_ref[:, G + Hhp:]
    z = jnp.maximum(
        jnp.dot(h.astype(jnp.bfloat16), w1,
                preferred_element_type=jnp.float32) + b1, 0.0)
    out_ref[...] = (jnp.dot(z.astype(jnp.bfloat16), w2,
                            preferred_element_type=jnp.float32) + b2)


def lstm_model_forward(x, hidden, params):
    """x: (B, T, D) batch-first, hidden: ((1, B, H), (1, B, H)).
    Returns (output (B, out_dim), (h_n (1,B,H), c_n (1,B,H)))."""
    h0, c0 = hidden
    B, T, D = x.shape
    d = params["dims"]
    H, O = d["H"], d["O"]
    Hp, Op = d["Hp"], d["Op"]
    Bp = ((B + 7) // 8) * 8            # pad batch to a sublane tile

    # batch-pad, time-major, flatten: row t*Bp + b == x[b, t, :]; bf16 MXU operand
    x_p = jnp.zeros((Bp, T, D), jnp.float32).at[:B].set(x)
    x_tm = jnp.transpose(x_p, (1, 0, 2)).reshape(T * Bp, D).astype(jnp.bfloat16)
    assert x_tm.shape[0] == T * Bp

    h0_p = jnp.zeros((Bp, Hp), jnp.float32).at[:B, :H].set(h0.reshape(B, H))
    c0_p = jnp.zeros((Bp, Hp), jnp.float32).at[:B, :H].set(c0.reshape(B, H))

    vmem = pl.BlockSpec(memory_space=pltpu.MemorySpace.VMEM)
    out, hN, cN = pl.pallas_call(
        lstm_mlp_kernel,
        out_shape=(jax.ShapeDtypeStruct((Bp, Op), jnp.float32),
                   jax.ShapeDtypeStruct((Bp, Hp), jnp.float32),
                   jax.ShapeDtypeStruct((Bp, Hp), jnp.float32)),
        in_specs=[vmem] * 6,
        out_specs=(vmem, vmem, vmem),
        scratch_shapes=[pltpu.VMEM((T * Bp, 4 * Hp), jnp.float32)],
    )(x_tm, h0_p, c0_p, params["w_rec"], params["w_mlp"], params["b_all"])

    out = out[:B, :O]
    hN = hN[:B, :H].reshape(1, B, H)
    cN = cN[:B, :H].reshape(1, B, H)
    return out, (hN, cN)


def init_params(key, input_dim, hidden_dim, out_dim, hp=128, hhp=128, op=128):
    """Deterministic synthetic parameters (shapes match nn.LSTM / nn.Linear).

    Kernel entries are gate-permuted (i,f,g,o)->(i,f,o,g), zero-padded so each
    gate block / MLP dim is a full 128-lane vreg, packed into 3 arrays, and
    weights cast to bf16. ref_* entries keep torch order/shape in f32 for the
    independent pure-JAX reference.
    """
    ks = jax.random.split(key, 8)
    H, D, O = hidden_dim, input_dim, out_dim
    Hh = H // 2
    Hp, Hhp, Op = hp, hhp, op
    assert Hp == Hhp, "w_mlp packing assumes padded Hp == padded Hh"
    s = 0.1
    w_ih = jax.random.normal(ks[0], (4 * H, D), jnp.float32) * s   # torch W_ih
    w_hh = jax.random.normal(ks[1], (4 * H, H), jnp.float32) * s   # torch W_hh
    b_ih = jax.random.normal(ks[2], (4 * H,), jnp.float32) * s
    b_hh = jax.random.normal(ks[3], (4 * H,), jnp.float32) * s
    w1 = jax.random.normal(ks[4], (Hh, H), jnp.float32) * s        # linear1
    b1 = jax.random.normal(ks[5], (Hh,), jnp.float32) * s
    w2 = jax.random.normal(ks[6], (O, Hh), jnp.float32) * s        # linear2
    b2 = jax.random.normal(ks[7], (O,), jnp.float32) * s
    b_gates = b_ih + b_hh

    # (i, f, g, o) -> (i, f, o, g) row permutation for the kernel weights.
    perm = np.concatenate([np.arange(0, H), np.arange(H, 2 * H),
                           np.arange(3 * H, 4 * H), np.arange(2 * H, 3 * H)])
    perm = jnp.asarray(perm)

    def pad_gate_cols(w_t):           # (rows, 4H) -> (rows, 4Hp), block k -> [k*Hp : k*Hp+H]
        rows = w_t.shape[0]
        out = jnp.zeros((rows, 4 * Hp), jnp.float32)
        for k in range(4):
            out = out.at[:, k * Hp:k * Hp + H].set(w_t[:, k * H:(k + 1) * H])
        return out

    def pad2(a, r, c):
        return jnp.zeros((r, c), jnp.float32).at[:a.shape[0], :a.shape[1]].set(a)

    # padded lanes get zero weight + zero bias -> padded h/c lanes stay exactly 0
    w_ih_t = pad_gate_cols(w_ih[perm].T)                           # (D, 4Hp)
    w_hh_t = pad2(pad_gate_cols(w_hh[perm].T), Hp, 4 * Hp)         # (Hp, 4Hp)
    bg_p = pad_gate_cols(b_gates[perm].reshape(1, 4 * H))          # (1, 4Hp)
    w1_t = pad2(w1.T, Hp, Hhp)                                     # (Hp, Hhp)
    b1_p = pad2(b1.reshape(1, Hh), 1, Hhp)                         # (1, Hhp)
    w2_t = pad2(w2.T, Hhp, Op)                                     # (Hhp, Op)
    b2_p = pad2(b2.reshape(1, O), 1, Op)                           # (1, Op)

    return {
        # kernel (packed, padded, bf16 MXU operands; biases stay f32)
        "w_rec": jnp.concatenate([w_ih_t, w_hh_t], axis=0).astype(jnp.bfloat16),
        "w_mlp": jnp.concatenate([w1_t, w2_t], axis=1).astype(jnp.bfloat16),
        "b_all": jnp.concatenate([bg_p, b1_p, b2_p], axis=1),      # (1, 4Hp+Hhp+Op) f32
        "dims": dict(D=D, H=H, Hh=Hh, O=O, Hp=Hp, Hhp=Hhp, Op=Op),
        # reference (torch gate order, unpadded, f32)
        "ref_w_ih_t": w_ih.T, "ref_w_hh_t": w_hh.T,
        "ref_b_gates": b_gates.reshape(1, 4 * H),
        "ref_w1_t": w1.T, "ref_b1": b1.reshape(1, Hh),
        "ref_w2_t": w2.T, "ref_b2": b2.reshape(1, O),
    }


def reference_forward(x, hidden, params):
    """Pure-JAX f32 reference (eval-mode semantics of LSTMModel.forward),
    using un-permuted, un-padded torch-ordered weights."""
    h, c = hidden[0][0], hidden[1][0]
    H = h.shape[-1]

    def step(carry, x_t):
        h, c = carry
        gates = (x_t @ params["ref_w_ih_t"] + h @ params["ref_w_hh_t"]
                 + params["ref_b_gates"])
        i = jax.nn.sigmoid(gates[:, 0 * H:1 * H])
        f = jax.nn.sigmoid(gates[:, 1 * H:2 * H])
        g = jnp.tanh(gates[:, 2 * H:3 * H])
        o = jax.nn.sigmoid(gates[:, 3 * H:4 * H])
        c = f * c + i * g
        h = o * jnp.tanh(c)
        return (h, c), None

    (h, c), _ = lax.scan(step, (h, c), jnp.transpose(x, (1, 0, 2)))
    z = jnp.maximum(h @ params["ref_w1_t"] + params["ref_b1"], 0.0)
    out = z @ params["ref_w2_t"] + params["ref_b2"]
    return out, (h[None], c[None])


if __name__ == "__main__":
    # Small shapes consistent with the module: batch=2, seq=8, input_dim=16,
    # hidden_dim=32, out_dim=4, n_layers=1.
    B, T, D, H, O = 2, 8, 16, 32, 4

    key = jax.random.PRNGKey(0)
    k_x, k_p = jax.random.split(key)
    x = jax.random.normal(k_x, (B, T, D), jnp.float32)
    params = init_params(k_p, D, H, O)

    # init_hidden(batch_size): zeros of shape (n_layers, B, H)
    hidden = (jnp.zeros((1, B, H), jnp.float32),
              jnp.zeros((1, B, H), jnp.float32))

    out, (hN, cN) = lstm_model_forward(x, hidden, params)
    out = jax.block_until_ready(out)
    hN = jax.block_until_ready(hN)
    cN = jax.block_until_ready(cN)

    out_ref, (hN_ref, cN_ref) = reference_forward(x, hidden, params)
    # Tolerance loosened vs the f32 reference because MXU operands are bf16.
    np.testing.assert_allclose(np.asarray(out), np.asarray(out_ref),
                               atol=2e-2, rtol=2e-2)
    np.testing.assert_allclose(np.asarray(hN), np.asarray(hN_ref),
                               atol=2e-2, rtol=2e-2)
    np.testing.assert_allclose(np.asarray(cN), np.asarray(cN_ref),
                               atol=2e-2, rtol=2e-2)

    print("KERNEL_OK")
</pallas_src>

<mosaic_0001>
module attributes {stable_mosaic.version = 11 : i64} {
  func.func @lstm_mlp_kernel(%arg0: memref<64x16xbf16, #tpu.memory_space<vmem>>, %arg1: memref<8x128xf32, #tpu.memory_space<vmem>>, %arg2: memref<8x128xf32, #tpu.memory_space<vmem>>, %arg3: memref<144x512xbf16, #tpu.memory_space<vmem>>, %arg4: memref<128x256xbf16, #tpu.memory_space<vmem>>, %arg5: memref<1x768xf32, #tpu.memory_space<vmem>>, %arg6: memref<8x128xf32, #tpu.memory_space<vmem>>, %arg7: memref<8x128xf32, #tpu.memory_space<vmem>>, %arg8: memref<8x128xf32, #tpu.memory_space<vmem>>, %arg9: memref<64x512xf32, #tpu.memory_space<vmem>>) attributes {dimension_semantics = [], scalar_prefetch = 0 : i64, scratch_operands = 1 : i64, tpu.core_type = #tpu.core_type<tc>} {
    %c0 = arith.constant 0 : index
    %c0_0 = arith.constant 0 : index
    %0 = vector.load %arg5[%c0, %c0_0] : memref<1x768xf32, #tpu.memory_space<vmem>>, vector<1x512xf32>
    %c0_1 = arith.constant 0 : index
    %c0_2 = arith.constant 0 : index
    %1 = vector.load %arg0[%c0_1, %c0_2] : memref<64x16xbf16, #tpu.memory_space<vmem>>, vector<64x16xbf16>
    %c0_3 = arith.constant 0 : index
    %c0_4 = arith.constant 0 : index
    %2 = vector.load %arg3[%c0_3, %c0_4] : memref<144x512xbf16, #tpu.memory_space<vmem>>, vector<16x512xbf16>
    %cst = arith.constant dense<0.000000e+00> : vector<64x512xf32>
    %3 = tpu.matmul %1, %2, %cst {dimension_numbers = #tpu.dot_dimension_numbers<[1], [0], [0], [1], [0, 0, 1, 1], [], []>} : vector<64x16xbf16>, vector<16x512xbf16>, vector<64x512xf32> -> vector<64x512xf32>
    %4 = vector.broadcast %0 : vector<1x512xf32> to vector<64x512xf32>
    %5 = arith.addf %3, %4 : vector<64x512xf32>
    %c0_5 = arith.constant 0 : index
    %c0_6 = arith.constant 0 : index
    %6 = vector.load %arg9[%c0_5, %c0_6] : memref<64x512xf32, #tpu.memory_space<vmem>>, vector<64x512xf32>
    tpu.vector_store %arg9[%c0_5, %c0_6], %5 {strides = array<i32>} : memref<64x512xf32, #tpu.memory_space<vmem>>, vector<64x512xf32>,
    %c16 = arith.constant 16 : index
    %c0_7 = arith.constant 0 : index
    %7 = vector.load %arg3[%c16, %c0_7] : memref<144x512xbf16, #tpu.memory_space<vmem>>, vector<128x512xbf16>
    %c0_8 = arith.constant 0 : index
    %c0_9 = arith.constant 0 : index
    %8 = vector.load %arg1[%c0_8, %c0_9] : memref<8x128xf32, #tpu.memory_space<vmem>>, vector<8x128xf32>
    %c0_10 = arith.constant 0 : index
    %c0_11 = arith.constant 0 : index
    %9 = vector.load %arg2[%c0_10, %c0_11] : memref<8x128xf32, #tpu.memory_space<vmem>>, vector<8x128xf32>
    %c0_12 = arith.constant 0 : index
    %c0_13 = arith.constant 0 : index
    %10 = vector.load %arg9[%c0_12, %c0_13] : memref<64x512xf32, #tpu.memory_space<vmem>>, vector<8x512xf32>
    %11 = arith.truncf %8 : vector<8x128xf32> to vector<8x128xbf16>
    %cst_14 = arith.constant dense<0.000000e+00> : vector<8x512xf32>
    %12 = tpu.matmul %11, %7, %cst_14 {dimension_numbers = #tpu.dot_dimension_numbers<[1], [0], [0], [1], [0, 0, 1, 1], [], []>} : vector<8x128xbf16>, vector<128x512xbf16>, vector<8x512xf32> -> vector<8x512xf32>
    %13 = arith.addf %10, %12 : vector<8x512xf32>
    %14 = vector.extract_strided_slice %13 {offsets = [0, 0], sizes = [8, 384], strides = [1, 1]} : vector<8x512xf32> to vector<8x384xf32>
    %15 = arith.negf %14 : vector<8x384xf32>
    %16 = math.exp %15 : vector<8x384xf32>
    %cst_15 = arith.constant 1.000000e+00 : f32
    %17 = vector.broadcast %cst_15 : f32 to vector<8x384xf32>
    %18 = arith.addf %17, %16 : vector<8x384xf32>
    %19 = arith.divf %17, %18 : vector<8x384xf32>
    %20 = vector.extract_strided_slice %19 {offsets = [0, 0], sizes = [8, 128], strides = [1, 1]} : vector<8x384xf32> to vector<8x128xf32>
    %21 = vector.extract_strided_slice %19 {offsets = [0, 128], sizes = [8, 128], strides = [1, 1]} : vector<8x384xf32> to vector<8x128xf32>
    %22 = vector.extract_strided_slice %19 {offsets = [0, 256], sizes = [8, 128], strides = [1, 1]} : vector<8x384xf32> to vector<8x128xf32>
    %23 = vector.extract_strided_slice %13 {offsets = [0, 384], sizes = [8, 128], strides = [1, 1]} : vector<8x512xf32> to vector<8x128xf32>
    %24 = math.tanh %23 : vector<8x128xf32>
    %25 = arith.mulf %21, %9 : vector<8x128xf32>
    %26 = arith.mulf %20, %24 : vector<8x128xf32>
    %27 = arith.addf %25, %26 : vector<8x128xf32>
    %28 = math.tanh %27 : vector<8x128xf32>
    %29 = arith.mulf %22, %28 : vector<8x128xf32>
    %c8 = arith.constant 8 : index
    %c0_16 = arith.constant 0 : index
    %30 = vector.load %arg9[%c8, %c0_16] : memref<64x512xf32, #tpu.memory_space<vmem>>, vector<8x512xf32>
    %31 = arith.truncf %29 : vector<8x128xf32> to vector<8x128xbf16>
    %cst_17 = arith.constant dense<0.000000e+00> : vector<8x512xf32>
    %32 = tpu.matmul %31, %7, %cst_17 {dimension_numbers = #tpu.dot_dimension_numbers<[1], [0], [0], [1], [0, 0, 1, 1], [], []>} : vector<8x128xbf16>, vector<128x512xbf16>, vector<8x512xf32> -> vector<8x512xf32>
    %33 = arith.addf %30, %32 : vector<8x512xf32>
    %34 = vector.extract_strided_slice %33 {offsets = [0, 0], sizes = [8, 384], strides = [1, 1]} : vector<8x512xf32> to vector<8x384xf32>
    %35 = arith.negf %34 : vector<8x384xf32>
    %36 = math.exp %35 : vector<8x384xf32>
    %cst_18 = arith.constant 1.000000e+00 : f32
    %37 = vector.broadcast %cst_18 : f32 to vector<8x384xf32>
    %38 = arith.addf %37, %36 : vector<8x384xf32>
    %39 = arith.divf %37, %38 : vector<8x384xf32>
    %40 = vector.extract_strided_slice %39 {offsets = [0, 0], sizes = [8, 128], strides = [1, 1]} : vector<8x384xf32> to vector<8x128xf32>
    %41 = vector.extract_strided_slice %39 {offsets = [0, 128], sizes = [8, 128], strides = [1, 1]} : vector<8x384xf32> to vector<8x128xf32>
    %42 = vector.extract_strided_slice %39 {offsets = [0, 256], sizes = [8, 128], strides = [1, 1]} : vector<8x384xf32> to vector<8x128xf32>
    %43 = vector.extract_strided_slice %33 {offsets = [0, 384], sizes = [8, 128], strides = [1, 1]} : vector<8x512xf32> to vector<8x128xf32>
    %44 = math.tanh %43 : vector<8x128xf32>
    %45 = arith.mulf %41, %27 : vector<8x128xf32>
    %46 = arith.mulf %40, %44 : vector<8x128xf32>
    %47 = arith.addf %45, %46 : vector<8x128xf32>
    %48 = math.tanh %47 : vector<8x128xf32>
    %49 = arith.mulf %42, %48 : vector<8x128xf32>
    %c16_19 = arith.constant 16 : index
    %c0_20 = arith.constant 0 : index
    %50 = vector.load %arg9[%c16_19, %c0_20] : memref<64x512xf32, #tpu.memory_space<vmem>>, vector<8x512xf32>
    %51 = arith.truncf %49 : vector<8x128xf32> to vector<8x128xbf16>
    %cst_21 = arith.constant dense<0.000000e+00> : vector<8x512xf32>
    %52 = tpu.matmul %51, %7, %cst_21 {dimension_numbers = #tpu.dot_dimension_numbers<[1], [0], [0], [1], [0, 0, 1, 1], [], []>} : vector<8x128xbf16>, vector<128x512xbf16>, vector<8x512xf32> -> vector<8x512xf32>
    %53 = arith.addf %50, %52 : vector<8x512xf32>
    %54 = vector.extract_strided_slice %53 {offsets = [0, 0], sizes = [8, 384], strides = [1, 1]} : vector<8x512xf32> to vector<8x384xf32>
    %55 = arith.negf %54 : vector<8x384xf32>
    %56 = math.exp %55 : vector<8x384xf32>
    %cst_22 = arith.constant 1.000000e+00 : f32
    %57 = vector.broadcast %cst_22 : f32 to vector<8x384xf32>
    %58 = arith.addf %57, %56 : vector<8x384xf32>
    %59 = arith.divf %57, %58 : vector<8x384xf32>
    %60 = vector.extract_strided_slice %59 {offsets = [0, 0], sizes = [8, 128], strides = [1, 1]} : vector<8x384xf32> to vector<8x128xf32>
    %61 = vector.extract_strided_slice %59 {offsets = [0, 128], sizes = [8, 128], strides = [1, 1]} : vector<8x384xf32> to vector<8x128xf32>
    %62 = vector.extract_strided_slice %59 {offsets = [0, 256], sizes = [8, 128], strides = [1, 1]} : vector<8x384xf32> to vector<8x128xf32>
    %63 = vector.extract_strided_slice %53 {offsets = [0, 384], sizes = [8, 128], strides = [1, 1]} : vector<8x512xf32> to vector<8x128xf32>
    %64 = math.tanh %63 : vector<8x128xf32>
    %65 = arith.mulf %61, %47 : vector<8x128xf32>
    %66 = arith.mulf %60, %64 : vector<8x128xf32>
    %67 = arith.addf %65, %66 : vector<8x128xf32>
    %68 = math.tanh %67 : vector<8x128xf32>
    %69 = arith.mulf %62, %68 : vector<8x128xf32>
    %c24 = arith.constant 24 : index
    %c0_23 = arith.constant 0 : index
    %70 = vector.load %arg9[%c24, %c0_23] : memref<64x512xf32, #tpu.memory_space<vmem>>, vector<8x512xf32>
    %71 = arith.truncf %69 : vector<8x128xf32> to vector<8x128xbf16>
    %cst_24 = arith.constant dense<0.000000e+00> : vector<8x512xf32>
    %72 = tpu.matmul %71, %7, %cst_24 {dimension_numbers = #tpu.dot_dimension_numbers<[1], [0], [0], [1], [0, 0, 1, 1], [], []>} : vector<8x128xbf16>, vector<128x512xbf16>, vector<8x512xf32> -> vector<8x512xf32>
    %73 = arith.addf %70, %72 : vector<8x512xf32>
    %74 = vector.extract_strided_slice %73 {offsets = [0, 0], sizes = [8, 384], strides = [1, 1]} : vector<8x512xf32> to vector<8x384xf32>
    %75 = arith.negf %74 : vector<8x384xf32>
    %76 = math.exp %75 : vector<8x384xf32>
    %cst_25 = arith.constant 1.000000e+00 : f32
    %77 = vector.broadcast %cst_25 : f32 to vector<8x384xf32>
    %78 = arith.addf %77, %76 : vector<8x384xf32>
    %79 = arith.divf %77, %78 : vector<8x384xf32>
    %80 = vector.extract_strided_slice %79 {offsets = [0, 0], sizes = [8, 128], strides = [1, 1]} : vector<8x384xf32> to vector<8x128xf32>
    %81 = vector.extract_strided_slice %79 {offsets = [0, 128], sizes = [8, 128], strides = [1, 1]} : vector<8x384xf32> to vector<8x128xf32>
    %82 = vector.extract_strided_slice %79 {offsets = [0, 256], sizes = [8, 128], strides = [1, 1]} : vector<8x384xf32> to vector<8x128xf32>
    %83 = vector.extract_strided_slice %73 {offsets = [0, 384], sizes = [8, 128], strides = [1, 1]} : vector<8x512xf32> to vector<8x128xf32>
    %84 = math.tanh %83 : vector<8x128xf32>
    %85 = arith.mulf %81, %67 : vector<8x128xf32>
    %86 = arith.mulf %80, %84 : vector<8x128xf32>
    %87 = arith.addf %85, %86 : vector<8x128xf32>
    %88 = math.tanh %87 : vector<8x128xf32>
    %89 = arith.mulf %82, %88 : vector<8x128xf32>
    %c32 = arith.constant 32 : index
    %c0_26 = arith.constant 0 : index
    %90 = vector.load %arg9[%c32, %c0_26] : memref<64x512xf32, #tpu.memory_space<vmem>>, vector<8x512xf32>
    %91 = arith.truncf %89 : vector<8x128xf32> to vector<8x128xbf16>
    %cst_27 = arith.constant dense<0.000000e+00> : vector<8x512xf32>
    %92 = tpu.matmul %91, %7, %cst_27 {dimension_numbers = #tpu.dot_dimension_numbers<[1], [0], [0], [1], [0, 0, 1, 1], [], []>} : vector<8x128xbf16>, vector<128x512xbf16>, vector<8x512xf32> -> vector<8x512xf32>
    %93 = arith.addf %90, %92 : vector<8x512xf32>
    %94 = vector.extract_strided_slice %93 {offsets = [0, 0], sizes = [8, 384], strides = [1, 1]} : vector<8x512xf32> to vector<8x384xf32>
    %95 = arith.negf %94 : vector<8x384xf32>
    %96 = math.exp %95 : vector<8x384xf32>
    %cst_28 = arith.constant 1.000000e+00 : f32
    %97 = vector.broadcast %cst_28 : f32 to vector<8x384xf32>
    %98 = arith.addf %97, %96 : vector<8x384xf32>
    %99 = arith.divf %97, %98 : vector<8x384xf32>
    %100 = vector.extract_strided_slice %99 {offsets = [0, 0], sizes = [8, 128], strides = [1, 1]} : vector<8x384xf32> to vector<8x128xf32>
    %101 = vector.extract_strided_slice %99 {offsets = [0, 128], sizes = [8, 128], strides = [1, 1]} : vector<8x384xf32> to vector<8x128xf32>
    %102 = vector.extract_strided_slice %99 {offsets = [0, 256], sizes = [8, 128], strides = [1, 1]} : vector<8x384xf32> to vector<8x128xf32>
    %103 = vector.extract_strided_slice %93 {offsets = [0, 384], sizes = [8, 128], strides = [1, 1]} : vector<8x512xf32> to vector<8x128xf32>
    %104 = math.tanh %103 : vector<8x128xf32>
    %105 = arith.mulf %101, %87 : vector<8x128xf32>
    %106 = arith.mulf %100, %104 : vector<8x128xf32>
    %107 = arith.addf %105, %106 : vector<8x128xf32>
    %108 = math.tanh %107 : vector<8x128xf32>
    %109 = arith.mulf %102, %108 : vector<8x128xf32>
    %c40 = arith.constant 40 : index
    %c0_29 = arith.constant 0 : index
    %110 = vector.load %arg9[%c40, %c0_29] : memref<64x512xf32, #tpu.memory_space<vmem>>, vector<8x512xf32>
    %111 = arith.truncf %109 : vector<8x128xf32> to vector<8x128xbf16>
    %cst_30 = arith.constant dense<0.000000e+00> : vector<8x512xf32>
    %112 = tpu.matmul %111, %7, %cst_30 {dimension_numbers = #tpu.dot_dimension_numbers<[1], [0], [0], [1], [0, 0, 1, 1], [], []>} : vector<8x128xbf16>, vector<128x512xbf16>, vector<8x512xf32> -> vector<8x512xf32>
    %113 = arith.addf %110, %112 : vector<8x512xf32>
    %114 = vector.extract_strided_slice %113 {offsets = [0, 0], sizes = [8, 384], strides = [1, 1]} : vector<8x512xf32> to vector<8x384xf32>
    %115 = arith.negf %114 : vector<8x384xf32>
    %116 = math.exp %115 : vector<8x384xf32>
    %cst_31 = arith.constant 1.000000e+00 : f32
    %117 = vector.broadcast %cst_31 : f32 to vector<8x384xf32>
    %118 = arith.addf %117, %116 : vector<8x384xf32>
    %119 = arith.divf %117, %118 : vector<8x384xf32>
    %120 = vector.extract_strided_slice %119 {offsets = [0, 0], sizes = [8, 128], strides = [1, 1]} : vector<8x384xf32> to vector<8x128xf32>
    %121 = vector.extract_strided_slice %119 {offsets = [0, 128], sizes = [8, 128], strides = [1, 1]} : vector<8x384xf32> to vector<8x128xf32>
    %122 = vector.extract_strided_slice %119 {offsets = [0, 256], sizes = [8, 128], strides = [1, 1]} : vector<8x384xf32> to vector<8x128xf32>
    %123 = vector.extract_strided_slice %113 {offsets = [0, 384], sizes = [8, 128], strides = [1, 1]} : vector<8x512xf32> to vector<8x128xf32>
    %124 = math.tanh %123 : vector<8x128xf32>
    %125 = arith.mulf %121, %107 : vector<8x128xf32>
    %126 = arith.mulf %120, %124 : vector<8x128xf32>
    %127 = arith.addf %125, %126 : vector<8x128xf32>
    %128 = math.tanh %127 : vector<8x128xf32>
    %129 = arith.mulf %122, %128 : vector<8x128xf32>
    %c48 = arith.constant 48 : index
    %c0_32 = arith.constant 0 : index
    %130 = vector.load %arg9[%c48, %c0_32] : memref<64x512xf32, #tpu.memory_space<vmem>>, vector<8x512xf32>
    %131 = arith.truncf %129 : vector<8x128xf32> to vector<8x128xbf16>
    %cst_33 = arith.constant dense<0.000000e+00> : vector<8x512xf32>
    %132 = tpu.matmul %131, %7, %cst_33 {dimension_numbers = #tpu.dot_dimension_numbers<[1], [0], [0], [1], [0, 0, 1, 1], [], []>} : vector<8x128xbf16>, vector<128x512xbf16>, vector<8x512xf32> -> vector<8x512xf32>
    %133 = arith.addf %130, %132 : vector<8x512xf32>
    %134 = vector.extract_strided_slice %133 {offsets = [0, 0], sizes = [8, 384], strides = [1, 1]} : vector<8x512xf32> to vector<8x384xf32>
    %135 = arith.negf %134 : vector<8x384xf32>
    %136 = math.exp %135 : vector<8x384xf32>
    %cst_34 = arith.constant 1.000000e+00 : f32
    %137 = vector.broadcast %cst_34 : f32 to vector<8x384xf32>
    %138 = arith.addf %137, %136 : vector<8x384xf32>
    %139 = arith.divf %137, %138 : vector<8x384xf32>
    %140 = vector.extract_strided_slice %139 {offsets = [0, 0], sizes = [8, 128], strides = [1, 1]} : vector<8x384xf32> to vector<8x128xf32>
    %141 = vector.extract_strided_slice %139 {offsets = [0, 128], sizes = [8, 128], strides = [1, 1]} : vector<8x384xf32> to vector<8x128xf32>
    %142 = vector.extract_strided_slice %139 {offsets = [0, 256], sizes = [8, 128], strides = [1, 1]} : vector<8x384xf32> to vector<8x128xf32>
    %143 = vector.extract_strided_slice %133 {offsets = [0, 384], sizes = [8, 128], strides = [1, 1]} : vector<8x512xf32> to vector<8x128xf32>
    %144 = math.tanh %143 : vector<8x128xf32>
    %145 = arith.mulf %141, %127 : vector<8x128xf32>
    %146 = arith.mulf %140, %144 : vector<8x128xf32>
    %147 = arith.addf %145, %146 : vector<8x128xf32>
    %148 = math.tanh %147 : vector<8x128xf32>
    %149 = arith.mulf %142, %148 : vector<8x128xf32>
    %c56 = arith.constant 56 : index
    %c0_35 = arith.constant 0 : index
    %150 = vector.load %arg9[%c56, %c0_35] : memref<64x512xf32, #tpu.memory_space<vmem>>, vector<8x512xf32>
    %151 = arith.truncf %149 : vector<8x128xf32> to vector<8x128xbf16>
    %cst_36 = arith.constant dense<0.000000e+00> : vector<8x512xf32>
    %152 = tpu.matmul %151, %7, %cst_36 {dimension_numbers = #tpu.dot_dimension_numbers<[1], [0], [0], [1], [0, 0, 1, 1], [], []>} : vector<8x128xbf16>, vector<128x512xbf16>, vector<8x512xf32> -> vector<8x512xf32>
    %153 = arith.addf %150, %152 : vector<8x512xf32>
    %154 = vector.extract_strided_slice %153 {offsets = [0, 0], sizes = [8, 384], strides = [1, 1]} : vector<8x512xf32> to vector<8x384xf32>
    %155 = arith.negf %154 : vector<8x384xf32>
    %156 = math.exp %155 : vector<8x384xf32>
    %cst_37 = arith.constant 1.000000e+00 : f32
    %157 = vector.broadcast %cst_37 : f32 to vector<8x384xf32>
    %158 = arith.addf %157, %156 : vector<8x384xf32>
    %159 = arith.divf %157, %158 : vector<8x384xf32>
    %160 = vector.extract_strided_slice %159 {offsets = [0, 0], sizes = [8, 128], strides = [1, 1]} : vector<8x384xf32> to vector<8x128xf32>
    %161 = vector.extract_strided_slice %159 {offsets = [0, 128], sizes = [8, 128], strides = [1, 1]} : vector<8x384xf32> to vector<8x128xf32>
    %162 = vector.extract_strided_slice %159 {offsets = [0, 256], sizes = [8, 128], strides = [1, 1]} : vector<8x384xf32> to vector<8x128xf32>
    %163 = vector.extract_strided_slice %153 {offsets = [0, 384], sizes = [8, 128], strides = [1, 1]} : vector<8x512xf32> to vector<8x128xf32>
    %164 = math.tanh %163 : vector<8x128xf32>
    %165 = arith.mulf %161, %147 : vector<8x128xf32>
    %166 = arith.mulf %160, %164 : vector<8x128xf32>
    %167 = arith.addf %165, %166 : vector<8x128xf32>
    %168 = math.tanh %167 : vector<8x128xf32>
    %169 = arith.mulf %162, %168 : vector<8x128xf32>
    %c0_38 = arith.constant 0 : index
    %c0_39 = arith.constant 0 : index
    %170 = vector.load %arg7[%c0_38, %c0_39] : memref<8x128xf32, #tpu.memory_space<vmem>>, vector<8x128xf32>
    tpu.vector_store %arg7[%c0_38, %c0_39], %169 {strides = array<i32>} : memref<8x128xf32, #tpu.memory_space<vmem>>, vector<8x128xf32>,
    %c0_40 = arith.constant 0 : index
    %c0_41 = arith.constant 0 : index
    %171 = vector.load %arg8[%c0_40, %c0_41] : memref<8x128xf32, #tpu.memory_space<vmem>>, vector<8x128xf32>
    tpu.vector_store %arg8[%c0_40, %c0_41], %167 {strides = array<i32>} : memref<8x128xf32, #tpu.memory_space<vmem>>, vector<8x128xf32>,
    %c0_42 = arith.constant 0 : index
    %c0_43 = arith.constant 0 : index
    %172 = vector.load %arg4[%c0_42, %c0_43] : memref<128x256xbf16, #tpu.memory_space<vmem>>, vector<128x128xbf16>
    %c0_44 = arith.constant 0 : index
    %c128 = arith.constant 128 : index
    %173 = vector.load %arg4[%c0_44, %c128] : memref<128x256xbf16, #tpu.memory_space<vmem>>, vector<128x128xbf16>
    %c0_45 = arith.constant 0 : index
    %c512 = arith.constant 512 : index
    %174 = vector.load %arg5[%c0_45, %c512] : memref<1x768xf32, #tpu.memory_space<vmem>>, vector<1x128xf32>
    %c0_46 = arith.constant 0 : index
    %c640 = arith.constant 640 : index
    %175 = vector.load %arg5[%c0_46, %c640] : memref<1x768xf32, #tpu.memory_space<vmem>>, vector<1x128xf32>
    %176 = arith.truncf %169 : vector<8x128xf32> to vector<8x128xbf16>
    %cst_47 = arith.constant dense<0.000000e+00> : vector<8x128xf32>
    %177 = tpu.matmul %176, %172, %cst_47 {dimension_numbers = #tpu.dot_dimension_numbers<[1], [0], [0], [1], [0, 0, 1, 1], [], []>} : vector<8x128xbf16>, vector<128x128xbf16>, vector<8x128xf32> -> vector<8x128xf32>
    %178 = vector.broadcast %174 : vector<1x128xf32> to vector<8x128xf32>
    %179 = arith.addf %177, %178 : vector<8x128xf32>
    %cst_48 = arith.constant 0.000000e+00 : f32
    %180 = vector.broadcast %cst_48 : f32 to vector<8x128xf32>
    %181 = arith.maximumf %179, %180 : vector<8x128xf32>
    %182 = arith.truncf %181 : vector<8x128xf32> to vector<8x128xbf16>
    %cst_49 = arith.constant dense<0.000000e+00> : vector<8x128xf32>
    %183 = tpu.matmul %182, %173, %cst_49 {dimension_numbers = #tpu.dot_dimension_numbers<[1], [0], [0], [1], [0, 0, 1, 1], [], []>} : vector<8x128xbf16>, vector<128x128xbf16>, vector<8x128xf32> -> vector<8x128xf32>
    %184 = vector.broadcast %175 : vector<1x128xf32> to vector<8x128xf32>
    %185 = arith.addf %183, %184 : vector<8x128xf32>
    %c0_50 = arith.constant 0 : index
    %c0_51 = arith.constant 0 : index
    %186 = vector.load %arg6[%c0_50, %c0_51] : memref<8x128xf32, #tpu.memory_space<vmem>>, vector<8x128xf32>
    tpu.vector_store %arg6[%c0_50, %c0_51], %185 {strides = array<i32>} : memref<8x128xf32, #tpu.memory_space<vmem>>, vector<8x128xf32>,
    return
  }
}

</mosaic_0001>

<llo_original>
// kernel: tpu_custom_call.1
$region0: #{tpu_custom_call.1}
  #allocation0 [shape = 'u32[]', space=smem, size = 0x4, offset = 0x4, fixed_abs, tag = 'smem constant byte address 0x4 - core index']
  #allocation1 [shape = 'u32[144,128]{1,0:T(1,128)}', space=vmem, size = 0x12000, scoped, tag = 'internal scratch']
  #allocation2 [shape = 'f32[64,512]{1,0:T(8,128)}', space=vmem, size = 0x20000, scoped, tag = 'scratch operand']
  %s0 = inlined_call_operand.vmem [shape: bf16[64,16], index: 0, kind: input, shape index: {}]
  %s1 = inlined_call_operand.vmem [shape: f32[8,128], index: 1, kind: input, shape index: {}]
  %s2 = inlined_call_operand.vmem [shape: f32[8,128], index: 2, kind: input, shape index: {}]
  %s3 = inlined_call_operand.hbm [shape: bf16[144,512], index: 3, kind: input, shape index: {}]
  %s4 = inlined_call_operand.hbm [shape: bf16[128,256], index: 4, kind: input, shape index: {}]
  %s5 = inlined_call_operand.vmem [shape: f32[1,768], index: 5, kind: input, shape index: {}]
  %s6 = inlined_call_operand.hbm [shape: f32[8,128], index: 6, kind: output, shape index: {0}]
  %s7 = inlined_call_operand.hbm [shape: f32[8,128], index: 7, kind: output, shape index: {1}]
  %s8 = inlined_call_operand.hbm [shape: f32[8,128], index: 8, kind: output, shape index: {2}]
  %9 = xla_tuple %s6, %s7, %s8
  %s10 = sld [smem:[#allocation0]]
  $region58: #{tpu_custom_call.1} parent=0
    _
  %s12 = ssub.s32 1, %s10
  %s13 = scalar_select 0, %s12, %s10
  $region1: #{tpu_custom_call.1} parent=0
    #allocation3 [shape = 'u8[147456]{0}', space=vmem, size = 0x24000, scoped, tag = 'input window, operand 3, single buffered']
    #allocation4 [shape = 's32[1]{0}', space=sflag, size = 0x4, scoped, tag = 'scoped memory for tpu_custom_call.1']
    #allocation5 [shape = 's32[1]{0}', space=sflag, size = 0x4, scoped, tag = 'scoped memory for tpu_custom_call.1']
    #allocation6 [shape = 'u8[65536]{0}', space=vmem, size = 0x10000, scoped, tag = 'input window, operand 4, single buffered']
    #allocation7 [shape = 's32[1]{0}', space=sflag, size = 0x4, scoped, tag = 'scoped memory for tpu_custom_call.1']
    #allocation8 [shape = 'u8[4096]{0}', space=vmem, size = 0x1000, scoped, tag = 'output window, operand 0, single buffered']
    #allocation9 [shape = 'u8[4096]{0}', space=vmem, size = 0x1000, scoped, tag = 'output window, operand 1, single buffered']
    #allocation10 [shape = 's32[1]{0}', space=sflag, size = 0x4, scoped, tag = 'scoped memory for tpu_custom_call.1']
    #allocation11 [shape = 'u8[4096]{0}', space=vmem, size = 0x1000, scoped, tag = 'output window, operand 2, single buffered']
    %14 = vsyncpa [#allocation4], 0
    %15 = vsyncpa [#allocation7], 0
    %16 = vsyncpa [#allocation5], 0
    %17 = vsyncpa [#allocation10], 0
    // Predicated region
    $region2: #{tpu_custom_call.1} parent=1 // pred_check
      _
    $region3: #{tpu_custom_call.1} parent=1 // pred_check_branch
      %19 = sbr.rel (0) target = $region5
    $region4: #{tpu_custom_call.1} parent=1 // pred_region
      _
    $region5: #{tpu_custom_call.1} parent=1 // pred_fallthru
      _
    // Predicated region
    $region6: #{tpu_custom_call.1} parent=1 // pred_check
      _
    $region7: #{tpu_custom_call.1} parent=1 // pred_check_branch
      %21 = sbr.rel (0) target = $region9
    $region8: #{tpu_custom_call.1} parent=1 // pred_region
      _
    $region9: #{tpu_custom_call.1} parent=1 // pred_fallthru
      _
    // Predicated region
    $region10: #{tpu_custom_call.1} parent=1 // pred_check
      _
    $region11: #{tpu_custom_call.1} parent=1 // pred_check_branch
      %23 = sbr.rel (0) target = $region13
    $region12: #{tpu_custom_call.1} parent=1 // pred_region
      _
    $region13: #{tpu_custom_call.1} parent=1 // pred_fallthru
      _
    // Predicated region
    $region14: #{tpu_custom_call.1} parent=1 // pred_check
      _
    $region15: #{tpu_custom_call.1} parent=1 // pred_check_branch
      %25 = sbr.rel (0) target = $region17
    $region16: #{tpu_custom_call.1} parent=1 // pred_region
      %s27 = ssub.s32 4608, 4608
      %28 = vsyncadd [#allocation4], %s27
      %s29 = sshll.u32 [#allocation3], 4
      %s30 = int_to_ptr.vmem [resolvable:$true] %s29
      %35 = dma.hbm_to_vmem [thread:$0]  %s3, 4608, %s30, [#allocation4], 256, 256, 16
    $region17: #{tpu_custom_call.1} parent=1 // pred_fallthru
      _
    // Predicated region
    $region18: #{tpu_custom_call.1} parent=1 // pred_check
      _
    $region19: #{tpu_custom_call.1} parent=1 // pred_check_branch
      %37 = sbr.rel (0) target = $region21
    $region20: #{tpu_custom_call.1} parent=1 // pred_region
      %s39 = ssub.s32 2048, 2048
      %40 = vsyncadd [#allocation7], %s39
      %s41 = sshll.u32 [#allocation6], 4
      %s42 = int_to_ptr.vmem [resolvable:$true] %s41
      %47 = dma.hbm_to_vmem [thread:$0]  %s4, 2048, %s42, [#allocation7], 128, 128, 8
    $region21: #{tpu_custom_call.1} parent=1 // pred_fallthru
      _
    // Predicated region
    $region22: #{tpu_custom_call.1} parent=1 // pred_check
      _
    $region23: #{tpu_custom_call.1} parent=1 // pred_check_branch
      %49 = sbr.rel (0) target = $region25
    $region24: #{tpu_custom_call.1} parent=1 // pred_region
      _
    $region25: #{tpu_custom_call.1} parent=1 // pred_fallthru
      _
    // Predicated region
    $region26: #{tpu_custom_call.1} parent=1 // pred_check
      _
    $region27: #{tpu_custom_call.1} parent=1 // pred_check_branch
      %51 = sbr.rel (0) target = $region29
    $region28: #{tpu_custom_call.1} parent=1 // pred_region
      %52 = dma.done [#allocation4], 4608
    $region29: #{tpu_custom_call.1} parent=1 // pred_fallthru
      _
    // Predicated region
    $region30: #{tpu_custom_call.1} parent=1 // pred_check
      _
    $region31: #{tpu_custom_call.1} parent=1 // pred_check_branch
      %54 = sbr.rel (0) target = $region33
    $region32: #{tpu_custom_call.1} parent=1 // pred_region
      %55 = dma.done [#allocation7], 2048
    $region33: #{tpu_custom_call.1} parent=1 // pred_fallthru
      _
    %v57 = vld [vmem:[%s5] sm:$0xf]
    %v58 = vld [vmem:[%s0] sm:$0xf]
    %v59 = vld [vmem:[%s0 + $0x4] sm:$0xf]
    %v60 = vld [vmem:[%s0 + $0x8] sm:$0xf]
    %v61 = vld [vmem:[%s0 + $0xc] sm:$0xf]
    %v62 = vld [vmem:[%s0 + $0x10] sm:$0xf]
    %v63 = vld [vmem:[%s0 + $0x14] sm:$0xf]
    %v64 = vld [vmem:[%s0 + $0x18] sm:$0xf]
    %v65 = vld [vmem:[%s0 + $0x1c] sm:$0xf]
    %v66 = vld [vmem:[#allocation3] sm:$0xff]
    %v67 = vld [vmem:[#allocation3 + $0x8] sm:$0xff]
    %v68 = vld [vmem:[#allocation3 + $0x10] sm:$0xff]
    %v69 = vld [vmem:[#allocation3 + $0x18] sm:$0xff]
    %v71 = vlaneseq
    %v72 = vshrl.u32 %v71, 7
    %v73 = vsub.s32 0, %v72
    %v74 = vrot.slane %v57, %v73
    %v75 = vlaneseq
    %v76 = vshrl.u32 %v75, 7
    %v77 = vsub.s32 1, %v76
    %v78 = vrot.slane %v57, %v77
    %v79 = vlaneseq
    %v80 = vshrl.u32 %v79, 7
    %v81 = vsub.s32 2, %v80
    %v82 = vrot.slane %v57, %v81
    %v83 = vlaneseq
    %v84 = vshrl.u32 %v83, 7
    %v85 = vsub.s32 3, %v84
    %v86 = vrot.slane %v57, %v85
    %v99 = vunpack.c.l.b16 %v58
    %v100 = vunpack.c.l.b16 %v59
    %v101 = vunpack.c.l.b16 %v60
    %v102 = vunpack.c.l.b16 %v61
    %v103 = vunpack.c.l.b16 %v62
    %v104 = vunpack.c.l.b16 %v63
    %v105 = vunpack.c.l.b16 %v64
    %v106 = vunpack.c.l.b16 %v65
    %v107 = vpack.c.b16 %v100, %v99
    %v108 = vpack.c.b16 %v102, %v101
    %v109 = vpack.c.b16 %v104, %v103
    %v110 = vpack.c.b16 %v106, %v105
    %v115 = vunpack.c.l.b16 %v66
    %v116 = vunpack.c.h.b16 %v66
    %v117 = vunpack.c.l.b16 %v67
    %v118 = vunpack.c.h.b16 %v67
    %v119 = vunpack.c.l.b16 %v68
    %v120 = vunpack.c.h.b16 %v68
    %v121 = vunpack.c.l.b16 %v69
    %v122 = vunpack.c.h.b16 %v69
    %v123 = vpack.c.b16 %v119, %v115
    %v124 = vpack.c.b16 %v120, %v116
    %v125 = vpack.c.b16 %v121, %v117
    %v126 = vpack.c.b16 %v122, %v118
    %vm131 = vcmask 130048
    %v133 = vsel %vm131, %v107, 0
    %v136 = vsel %vm131, %v108, 0
    %v139 = vsel %vm131, %v109, 0
    %v142 = vsel %vm131, %v110, 0
    %144 = vmatprep.subr.bf16.mxu0 %v124
    %145 = vmatpush1.bf16.msra.mxu0 %v123
    %146 = vmatprep.subr.bf16.mxu0 0
    %147 = vmatpush1.bf16.msra.mxu0 0
    %148 = vmatprep.subr.bf16.mxu0 0
    %149 = vmatpush1.bf16.msra.mxu0 0
    %150 = vmatprep.subr.bf16.mxu0 0
    %151 = vmatpush1.bf16.msra.mxu0 0
    %152 = vmatprep.subr.bf16.mxu0 0
    %153 = vmatpush1.bf16.msra.mxu0 0
    %154 = vmatprep.subr.bf16.mxu0 0
    %155 = vmatpush1.bf16.msra.mxu0 0
    %156 = vmatprep.subr.bf16.mxu0 0
    %157 = vmatpush1.bf16.msra.mxu0 0
    %158 = vmatprep.subr.bf16.mxu0 0
    %159 = vmatpush1.bf16.msra.mxu0 0
    %160 = vmatprep.subr.bf16.mxu0 0
    %161 = vmatpush1.bf16.msra.mxu0 0
    %162 = vmatprep.subr.bf16.mxu0 0
    %163 = vmatpush1.bf16.msra.mxu0 0
    %164 = vmatprep.subr.bf16.mxu0 0
    %165 = vmatpush1.bf16.msra.mxu0 0
    %166 = vmatprep.subr.bf16.mxu0 0
    %167 = vmatpush1.bf16.msra.mxu0 0
    %168 = vmatprep.subr.bf16.mxu0 0
    %169 = vmatpush1.bf16.msra.mxu0 0
    %170 = vmatprep.subr.bf16.mxu0 0
    %171 = vmatpush1.bf16.msra.mxu0 0
    %172 = vmatprep.subr.bf16.mxu0 0
    %173 = vmatpush1.bf16.msra.mxu0 0
    %174 = vmatprep.subr.bf16.mxu0 0
    %175 = vmatpush1.bf16.msra.mxu0 0
    %176 = vmatprep.mubr.bf16.mxu0 0
    %177 = vmatmul.mubr.bf16.gmra.mrb[0].mxu0 %v133
    %v178 = vpop.f32.mrb[0].mxu0
    %v179 = vadd.f32 %v74, %v178
    %v180 = vpop.f32.mrb[0].mxu0
    %v181 = vadd.f32 %v78, %v180
    %v182 = vpop.f32.mrb[0].mxu0
    %v183 = vadd.f32 %v74, %v182
    %v184 = vpop.f32.mrb[0].mxu0
    %v185 = vadd.f32 %v78, %v184
    %186 = vmatprep.mubr.bf16.mxu0 0
    %187 = vmatmul.mubr.bf16.gmra.mrb[0].mxu0 %v136
    %v188 = vpop.f32.mrb[0].mxu0
    %v189 = vadd.f32 %v74, %v188
    %v190 = vpop.f32.mrb[0].mxu0
    %v191 = vadd.f32 %v78, %v190
    %v192 = vpop.f32.mrb[0].mxu0
    %v193 = vadd.f32 %v74, %v192
    %v194 = vpop.f32.mrb[0].mxu0
    %v195 = vadd.f32 %v78, %v194
    %196 = vmatprep.mubr.bf16.mxu0 0
    %197 = vmatmul.mubr.bf16.gmra.mrb[0].mxu0 %v139
    %v198 = vpop.f32.mrb[0].mxu0
    %v199 = vadd.f32 %v74, %v198
    %v200 = vpop.f32.mrb[0].mxu0
    %v201 = vadd.f32 %v78, %v200
    %v202 = vpop.f32.mrb[0].mxu0
    %v203 = vadd.f32 %v74, %v202
    %v204 = vpop.f32.mrb[0].mxu0
    %v205 = vadd.f32 %v78, %v204
    %206 = vmatprep.mubr.bf16.mxu0 0
    %207 = vmatmul.mubr.bf16.gmra.mrb[0].mxu0 %v142
    %v208 = vpop.f32.mrb[0].mxu0
    %v209 = vadd.f32 %v74, %v208
    %v210 = vpop.f32.mrb[0].mxu0
    %v211 = vadd.f32 %v78, %v210
    %v212 = vpop.f32.mrb[0].mxu0
    %v213 = vadd.f32 %v74, %v212
    %v214 = vpop.f32.mrb[0].mxu0
    %v215 = vadd.f32 %v78, %v214
    %216 = vdwg.mxu0
    %217 = vmatprep.subr.bf16.mxu0 %v126
    %218 = vmatpush1.bf16.msra.mxu0 %v125
    %219 = vmatprep.subr.bf16.mxu0 0
    %220 = vmatpush1.bf16.msra.mxu0 0
    %221 = vmatprep.subr.bf16.mxu0 0
    %222 = vmatpush1.bf16.msra.mxu0 0
    %223 = vmatprep.subr.bf16.mxu0 0
    %224 = vmatpush1.bf16.msra.mxu0 0
    %225 = vmatprep.subr.bf16.mxu0 0
    %226 = vmatpush1.bf16.msra.mxu0 0
    %227 = vmatprep.subr.bf16.mxu0 0
    %228 = vmatpush1.bf16.msra.mxu0 0
    %229 = vmatprep.subr.bf16.mxu0 0
    %230 = vmatpush1.bf16.msra.mxu0 0
    %231 = vmatprep.subr.bf16.mxu0 0
    %232 = vmatpush1.bf16.msra.mxu0 0
    %233 = vmatprep.subr.bf16.mxu0 0
    %234 = vmatpush1.bf16.msra.mxu0 0
    %235 = vmatprep.subr.bf16.mxu0 0
    %236 = vmatpush1.bf16.msra.mxu0 0
    %237 = vmatprep.subr.bf16.mxu0 0
    %238 = vmatpush1.bf16.msra.mxu0 0
    %239 = vmatprep.subr.bf16.mxu0 0
    %240 = vmatpush1.bf16.msra.mxu0 0
    %241 = vmatprep.subr.bf16.mxu0 0
    %242 = vmatpush1.bf16.msra.mxu0 0
    %243 = vmatprep.subr.bf16.mxu0 0
    %244 = vmatpush1.bf16.msra.mxu0 0
    %245 = vmatprep.subr.bf16.mxu0 0
    %246 = vmatpush1.bf16.msra.mxu0 0
    %247 = vmatprep.subr.bf16.mxu0 0
    %248 = vmatpush1.bf16.msra.mxu0 0
    %249 = vmatprep.mubr.bf16.mxu0 0
    %250 = vmatmul.mubr.bf16.gmra.mrb[0].mxu0 %v133
    %v251 = vpop.f32.mrb[0].mxu0
    %v252 = vadd.f32 %v82, %v251
    %v253 = vpop.f32.mrb[0].mxu0
    %v254 = vadd.f32 %v86, %v253
    %v255 = vpop.f32.mrb[0].mxu0
    %v256 = vadd.f32 %v82, %v255
    %v257 = vpop.f32.mrb[0].mxu0
    %v258 = vadd.f32 %v86, %v257
    %259 = vmatprep.mubr.bf16.mxu0 0
    %260 = vmatmul.mubr.bf16.gmra.mrb[0].mxu0 %v136
    %v261 = vpop.f32.mrb[0].mxu0
    %v262 = vadd.f32 %v82, %v261
    %v263 = vpop.f32.mrb[0].mxu0
    %v264 = vadd.f32 %v86, %v263
    %v265 = vpop.f32.mrb[0].mxu0
    %v266 = vadd.f32 %v82, %v265
    %v267 = vpop.f32.mrb[0].mxu0
    %v268 = vadd.f32 %v86, %v267
    %269 = vmatprep.mubr.bf16.mxu0 0
    %270 = vmatmul.mubr.bf16.gmra.mrb[0].mxu0 %v139
    %v271 = vpop.f32.mrb[0].mxu0
    %v272 = vadd.f32 %v82, %v271
    %v273 = vpop.f32.mrb[0].mxu0
    %v274 = vadd.f32 %v86, %v273
    %v275 = vpop.f32.mrb[0].mxu0
    %v276 = vadd.f32 %v82, %v275
    %v277 = vpop.f32.mrb[0].mxu0
    %v278 = vadd.f32 %v86, %v277
    %279 = vmatprep.mubr.bf16.mxu0 0
    %280 = vmatmul.mubr.bf16.gmra.mrb[0].mxu0 %v142
    %v281 = vpop.f32.mrb[0].mxu0
    %v282 = vadd.f32 %v82, %v281
    %v283 = vpop.f32.mrb[0].mxu0
    %v284 = vadd.f32 %v86, %v283
    %v285 = vpop.f32.mrb[0].mxu0
    %v286 = vadd.f32 %v82, %v285
    %v287 = vpop.f32.mrb[0].mxu0
    %v288 = vadd.f32 %v86, %v287
    %289 = vdwg.mxu0
    %290 = vst [vmem:[#allocation2] sm:$0xff] %v179
    %291 = vst [vmem:[#allocation2 + $0x8] sm:$0xff] %v181
    %292 = vst [vmem:[#allocation2 + $0x10] sm:$0xff] %v252
    %293 = vst [vmem:[#allocation2 + $0x18] sm:$0xff] %v254
    %294 = vst [vmem:[#allocation2 + $0x20] sm:$0xff] %v183
    %295 = vst [vmem:[#allocation2 + $0x28] sm:$0xff] %v185
    %296 = vst [vmem:[#allocation2 + $0x30] sm:$0xff] %v256
    %297 = vst [vmem:[#allocation2 + $0x38] sm:$0xff] %v258
    %298 = vst [vmem:[#allocation2 + $0x40] sm:$0xff] %v189
    %299 = vst [vmem:[#allocation2 + $0x48] sm:$0xff] %v191
    %300 = vst [vmem:[#allocation2 + $0x50] sm:$0xff] %v262
    %301 = vst [vmem:[#allocation2 + $0x58] sm:$0xff] %v264
    %302 = vst [vmem:[#allocation2 + $0x60] sm:$0xff] %v193
    %303 = vst [vmem:[#allocation2 + $0x68] sm:$0xff] %v195
    %304 = vst [vmem:[#allocation2 + $0x70] sm:$0xff] %v266
    %305 = vst [vmem:[#allocation2 + $0x78] sm:$0xff] %v268
    %306 = vst [vmem:[#allocation2 + $0x80] sm:$0xff] %v199
    %307 = vst [vmem:[#allocation2 + $0x88] sm:$0xff] %v201
    %308 = vst [vmem:[#allocation2 + $0x90] sm:$0xff] %v272
    %309 = vst [vmem:[#allocation2 + $0x98] sm:$0xff] %v274
    %310 = vst [vmem:[#allocation2 + $0xa0] sm:$0xff] %v203
    %311 = vst [vmem:[#allocation2 + $0xa8] sm:$0xff] %v205
    %312 = vst [vmem:[#allocation2 + $0xb0] sm:$0xff] %v276
    %313 = vst [vmem:[#allocation2 + $0xb8] sm:$0xff] %v278
    %314 = vst [vmem:[#allocation2 + $0xc0] sm:$0xff] %v209
    %315 = vst [vmem:[#allocation2 + $0xc8] sm:$0xff] %v211
    %316 = vst [vmem:[#allocation2 + $0xd0] sm:$0xff] %v282
    %317 = vst [vmem:[#allocation2 + $0xd8] sm:$0xff] %v284
    %318 = vst [vmem:[#allocation2 + $0xe0] sm:$0xff] %v213
    %319 = vst [vmem:[#allocation2 + $0xe8] sm:$0xff] %v215
    %320 = vst [vmem:[#allocation2 + $0xf0] sm:$0xff] %v286
    %321 = vst [vmem:[#allocation2 + $0xf8] sm:$0xff] %v288
    %v322 = vld [vmem:[#allocation3 + $0x20] sm:$0xff]
    %v323 = vld [vmem:[#allocation3 + $0x28] sm:$0xff]
    %v324 = vld [vmem:[#allocation3 + $0x30] sm:$0xff]
    %v325 = vld [vmem:[#allocation3 + $0x38] sm:$0xff]
    %v326 = vld [vmem:[#allocation3 + $0x40] sm:$0xff]
    %v327 = vld [vmem:[#allocation3 + $0x48] sm:$0xff]
    %v328 = vld [vmem:[#allocation3 + $0x50] sm:$0xff]
    %v329 = vld [vmem:[#allocation3 + $0x58] sm:$0xff]
    %v330 = vld [vmem:[#allocation3 + $0x60] sm:$0xff]
    %v331 = vld [vmem:[#allocation3 + $0x68] sm:$0xff]
    %v332 = vld [vmem:[#allocation3 + $0x70] sm:$0xff]
    %v333 = vld [vmem:[#allocation3 + $0x78] sm:$0xff]
    %v334 = vld [vmem:[#allocation3 + $0x80] sm:$0xff]
    %v335 = vld [vmem:[#allocation3 + $0x88] sm:$0xff]
    %v336 = vld [vmem:[#allocation3 + $0x90] sm:$0xff]
    %v337 = vld [vmem:[#allocation3 + $0x98] sm:$0xff]
    %v338 = vld [vmem:[#allocation3 + $0xa0] sm:$0xff]
    %v339 = vld [vmem:[#allocation3 + $0xa8] sm:$0xff]
    %v340 = vld [vmem:[#allocation3 + $0xb0] sm:$0xff]
    %v341 = vld [vmem:[#allocation3 + $0xb8] sm:$0xff]
    %v342 = vld [vmem:[#allocation3 + $0xc0] sm:$0xff]
    %v343 = vld [vmem:[#allocation3 + $0xc8] sm:$0xff]
    %v344 = vld [vmem:[#allocation3 + $0xd0] sm:$0xff]
    %v345 = vld [vmem:[#allocation3 + $0xd8] sm:$0xff]
    %v346 = vld [vmem:[#allocation3 + $0xe0] sm:$0xff]
    %v347 = vld [vmem:[#allocation3 + $0xe8] sm:$0xff]
    %v348 = vld [vmem:[#allocation3 + $0xf0] sm:$0xff]
    %v349 = vld [vmem:[#allocation3 + $0xf8] sm:$0xff]
    %v350 = vld [vmem:[#allocation3 + $0x100] sm:$0xff]
    %v351 = vld [vmem:[#allocation3 + $0x108] sm:$0xff]
    %v352 = vld [vmem:[#allocation3 + $0x110] sm:$0xff]
    %v353 = vld [vmem:[#allocation3 + $0x118] sm:$0xff]
    %v354 = vld [vmem:[%s1] sm:$0xff]
    %v355 = vld [vmem:[%s2] sm:$0xff]
    %v356 = vld [vmem:[#allocation2] sm:$0xff]
    %v357 = vld [vmem:[#allocation2 + $0x8] sm:$0xff]
    %v358 = vld [vmem:[#allocation2 + $0x10] sm:$0xff]
    %v359 = vld [vmem:[#allocation2 + $0x18] sm:$0xff]
    %v360 = vpack.c.bf16 %v354, %v354
    %v393 = vunpack.c.l.b16 %v322
    %v394 = vunpack.c.h.b16 %v322
    %v395 = vunpack.c.l.b16 %v323
    %v396 = vunpack.c.h.b16 %v323
    %v397 = vunpack.c.l.b16 %v324
    %v398 = vunpack.c.h.b16 %v324
    %v399 = vunpack.c.l.b16 %v325
    %v400 = vunpack.c.h.b16 %v325
    %v401 = vunpack.c.l.b16 %v326
    %v402 = vunpack.c.h.b16 %v326
    %v403 = vunpack.c.l.b16 %v327
    %v404 = vunpack.c.h.b16 %v327
    %v405 = vunpack.c.l.b16 %v328
    %v406 = vunpack.c.h.b16 %v328
    %v407 = vunpack.c.l.b16 %v329
    %v408 = vunpack.c.h.b16 %v329
    %v409 = vunpack.c.l.b16 %v330
    %v410 = vunpack.c.h.b16 %v330
    %v411 = vunpack.c.l.b16 %v331
    %v412 = vunpack.c.h.b16 %v331
    %v413 = vunpack.c.l.b16 %v332
    %v414 = vunpack.c.h.b16 %v332
    %v415 = vunpack.c.l.b16 %v333
    %v416 = vunpack.c.h.b16 %v333
    %v417 = vunpack.c.l.b16 %v334
    %v418 = vunpack.c.h.b16 %v334
    %v419 = vunpack.c.l.b16 %v335
    %v420 = vunpack.c.h.b16 %v335
    %v421 = vunpack.c.l.b16 %v336
    %v422 = vunpack.c.h.b16 %v336
    %v423 = vunpack.c.l.b16 %v337
    %v424 = vunpack.c.h.b16 %v337
    %v425 = vunpack.c.l.b16 %v338
    %v426 = vunpack.c.h.b16 %v338
    %v427 = vunpack.c.l.b16 %v339
    %v428 = vunpack.c.h.b16 %v339
    %v429 = vunpack.c.l.b16 %v340
    %v430 = vunpack.c.h.b16 %v340
    %v431 = vunpack.c.l.b16 %v341
    %v432 = vunpack.c.h.b16 %v341
    %v433 = vunpack.c.l.b16 %v342
    %v434 = vunpack.c.h.b16 %v342
    %v435 = vunpack.c.l.b16 %v343
    %v436 = vunpack.c.h.b16 %v343
    %v437 = vunpack.c.l.b16 %v344
    %v438 = vunpack.c.h.b16 %v344
    %v439 = vunpack.c.l.b16 %v345
    %v440 = vunpack.c.h.b16 %v345
    %v441 = vunpack.c.l.b16 %v346
    %v442 = vunpack.c.h.b16 %v346
    %v443 = vunpack.c.l.b16 %v347
    %v444 = vunpack.c.h.b16 %v347
    %v445 = vunpack.c.l.b16 %v348
    %v446 = vunpack.c.h.b16 %v348
    %v447 = vunpack.c.l.b16 %v349
    %v448 = vunpack.c.h.b16 %v349
    %v449 = vunpack.c.l.b16 %v350
    %v450 = vunpack.c.h.b16 %v350
    %v451 = vunpack.c.l.b16 %v351
    %v452 = vunpack.c.h.b16 %v351
    %v453 = vunpack.c.l.b16 %v352
    %v454 = vunpack.c.h.b16 %v352
    %v455 = vunpack.c.l.b16 %v353
    %v456 = vunpack.c.h.b16 %v353
    %v457 = vpack.c.b16 %v397, %v393
    %v458 = vpack.c.b16 %v398, %v394
    %v459 = vpack.c.b16 %v399, %v395
    %v460 = vpack.c.b16 %v400, %v396
    %v461 = vpack.c.b16 %v405, %v401
    %v462 = vpack.c.b16 %v406, %v402
    %v463 = vpack.c.b16 %v407, %v403
    %v464 = vpack.c.b16 %v408, %v404
    %v465 = vpack.c.b16 %v413, %v409
    %v466 = vpack.c.b16 %v414, %v410
    %v467 = vpack.c.b16 %v415, %v411
    %v468 = vpack.c.b16 %v416, %v412
    %v469 = vpack.c.b16 %v421, %v417
    %v470 = vpack.c.b16 %v422, %v418
    %v471 = vpack.c.b16 %v423, %v419
    %v472 = vpack.c.b16 %v424, %v420
    %v473 = vpack.c.b16 %v429, %v425
    %v474 = vpack.c.b16 %v430, %v426
    %v475 = vpack.c.b16 %v431, %v427
    %v476 = vpack.c.b16 %v432, %v428
    %v477 = vpack.c.b16 %v437, %v433
    %v478 = vpack.c.b16 %v438, %v434
    %v479 = vpack.c.b16 %v439, %v435
    %v480 = vpack.c.b16 %v440, %v436
    %v481 = vpack.c.b16 %v445, %v441
    %v482 = vpack.c.b16 %v446, %v442
    %v483 = vpack.c.b16 %v447, %v443
    %v484 = vpack.c.b16 %v448, %v444
    %v485 = vpack.c.b16 %v453, %v449
    %v486 = vpack.c.b16 %v454, %v450
    %v487 = vpack.c.b16 %v455, %v451
    %v488 = vpack.c.b16 %v456, %v452
    %521 = vmatprep.subr.bf16.mxu0 %v458
    %522 = vmatpush1.bf16.msra.mxu0 %v457
    %523 = vmatprep.subr.bf16.mxu0 %v462
    %524 = vmatpush1.bf16.msra.mxu0 %v461
    %525 = vmatprep.subr.bf16.mxu0 %v466
    %526 = vmatpush1.bf16.msra.mxu0 %v465
    %527 = vmatprep.subr.bf16.mxu0 %v470
    %528 = vmatpush1.bf16.msra.mxu0 %v469
    %529 = vmatprep.subr.bf16.mxu0 %v474
    %530 = vmatpush1.bf16.msra.mxu0 %v473
    %531 = vmatprep.subr.bf16.mxu0 %v478
    %532 = vmatpush1.bf16.msra.mxu0 %v477
    %533 = vmatprep.subr.bf16.mxu0 %v482
    %534 = vmatpush1.bf16.msra.mxu0 %v481
    %535 = vmatprep.subr.bf16.mxu0 %v486
    %536 = vmatpush1.bf16.msra.mxu0 %v485
    %537 = vmatprep.subr.bf16.mxu0 0
    %538 = vmatpush1.bf16.msra.mxu0 0
    %539 = vmatprep.subr.bf16.mxu0 0
    %540 = vmatpush1.bf16.msra.mxu0 0
    %541 = vmatprep.subr.bf16.mxu0 0
    %542 = vmatpush1.bf16.msra.mxu0 0
    %543 = vmatprep.subr.bf16.mxu0 0
    %544 = vmatpush1.bf16.msra.mxu0 0
    %545 = vmatprep.subr.bf16.mxu0 0
    %546 = vmatpush1.bf16.msra.mxu0 0
    %547 = vmatprep.subr.bf16.mxu0 0
    %548 = vmatpush1.bf16.msra.mxu0 0
    %549 = vmatprep.subr.bf16.mxu0 0
    %550 = vmatpush1.bf16.msra.mxu0 0
    %551 = vmatprep.subr.bf16.mxu0 0
    %552 = vmatpush1.bf16.msra.mxu0 0
    %553 = vmatprep.mubr.bf16.mxu0 0
    %554 = vmatmul.mubr.bf16.gmra.mrb[0].mxu0 %v360
    %v555 = vpop.f32.mrb[0].mxu0
    %v556 = vadd.f32 0.0, %v555
    %v557 = vpop.f32.mrb[0].mxu0
    %v558 = vadd.f32 0.0, %v557
    %v559 = vpop.f32.mrb[0].mxu0
    %v560 = vpop.f32.mrb[0].mxu0
    %561 = vdwg.mxu0
    %562 = vmatprep.subr.bf16.mxu0 %v460
    %563 = vmatpush1.bf16.msra.mxu0 %v459
    %564 = vmatprep.subr.bf16.mxu0 %v464
    %565 = vmatpush1.bf16.msra.mxu0 %v463
    %566 = vmatprep.subr.bf16.mxu0 %v468
    %567 = vmatpush1.bf16.msra.mxu0 %v467
    %568 = vmatprep.subr.bf16.mxu0 %v472
    %569 = vmatpush1.bf16.msra.mxu0 %v471
    %570 = vmatprep.subr.bf16.mxu0 %v476
    %571 = vmatpush1.bf16.msra.mxu0 %v475
    %572 = vmatprep.subr.bf16.mxu0 %v480
    %573 = vmatpush1.bf16.msra.mxu0 %v479
    %574 = vmatprep.subr.bf16.mxu0 %v484
    %575 = vmatpush1.bf16.msra.mxu0 %v483
    %576 = vmatprep.subr.bf16.mxu0 %v488
    %577 = vmatpush1.bf16.msra.mxu0 %v487
    %578 = vmatprep.subr.bf16.mxu0 0
    %579 = vmatpush1.bf16.msra.mxu0 0
    %580 = vmatprep.subr.bf16.mxu0 0
    %581 = vmatpush1.bf16.msra.mxu0 0
    %582 = vmatprep.subr.bf16.mxu0 0
    %583 = vmatpush1.bf16.msra.mxu0 0
    %584 = vmatprep.subr.bf16.mxu0 0
    %585 = vmatpush1.bf16.msra.mxu0 0
    %586 = vmatprep.subr.bf16.mxu0 0
    %587 = vmatpush1.bf16.msra.mxu0 0
    %588 = vmatprep.subr.bf16.mxu0 0
    %589 = vmatpush1.bf16.msra.mxu0 0
    %590 = vmatprep.subr.bf16.mxu0 0
    %591 = vmatpush1.bf16.msra.mxu0 0
    %592 = vmatprep.subr.bf16.mxu0 0
    %593 = vmatpush1.bf16.msra.mxu0 0
    %594 = vmatprep.mubr.bf16.mxu0 0
    %595 = vmatmul.mubr.bf16.gmra.mrb[0].mxu0 %v360
    %v596 = vpop.f32.mrb[0].mxu0
    %v597 = vadd.f32 0.0, %v596
    %v598 = vpop.f32.mrb[0].mxu0
    %v599 = vadd.f32 0.0, %v598
    %v600 = vpop.f32.mrb[0].mxu0
    %v601 = vpop.f32.mrb[0].mxu0
    %602 = vdwg.mxu0
    %v603 = vadd.f32 %v356, %v556
    %v604 = vadd.f32 %v357, %v558
    %v605 = vadd.f32 %v358, %v597
    %v606 = vadd.f32 %v359, %v599
    %v607 = vxor.u32 %v603, 2147483648
    %v608 = vxor.u32 %v604, 2147483648
    %v609 = vxor.u32 %v605, 2147483648
    %v610 = vmul.f32 %v607, 1.442695
    %v611 = vpow.pop %v610
    %v612 = vmul.f32 %v608, 1.442695
    %v613 = vpow.pop %v612
    %v614 = vmul.f32 %v609, 1.442695
    %v615 = vpow.pop %v614
    %v616 = vadd.f32 %v611, 1.0
    %v617 = vadd.f32 %v613, 1.0
    %v618 = vadd.f32 %v615, 1.0
    %v619 = vrcp.pop %v616
    %v620 = vmul.f32 1.0, %v619
    %v621 = vrcp.pop %v617
    %v622 = vmul.f32 1.0, %v621
    %v623 = vrcp.pop %v618
    %v624 = vmul.f32 1.0, %v623
    %v625 = vtanh.pop %v606
    %v626 = vmul.f32 %v622, %v355
    %v627 = vmul.f32 %v620, %v625
    %v628 = vadd.f32 %v626, %v627
    %v629 = vtanh.pop %v628
    %v630 = vmul.f32 %v624, %v629
    %v631 = vld [vmem:[#allocation2 + $0x20] sm:$0xff]
    %v632 = vld [vmem:[#allocation2 + $0x28] sm:$0xff]
    %v633 = vld [vmem:[#allocation2 + $0x30] sm:$0xff]
    %v634 = vld [vmem:[#allocation2 + $0x38] sm:$0xff]
    %v635 = vpack.c.bf16 %v630, %v630
    %636 = vmatprep.subr.bf16.mxu0 %v458
    %637 = vmatpush1.bf16.msra.mxu0 %v457
    %638 = vmatprep.subr.bf16.mxu0 %v462
    %639 = vmatpush1.bf16.msra.mxu0 %v461
    %640 = vmatprep.subr.bf16.mxu0 %v466
    %641 = vmatpush1.bf16.msra.mxu0 %v465
    %642 = vmatprep.subr.bf16.mxu0 %v470
    %643 = vmatpush1.bf16.msra.mxu0 %v469
    %644 = vmatprep.subr.bf16.mxu0 %v474
    %645 = vmatpush1.bf16.msra.mxu0 %v473
    %646 = vmatprep.subr.bf16.mxu0 %v478
    %647 = vmatpush1.bf16.msra.mxu0 %v477
    %648 = vmatprep.subr.bf16.mxu0 %v482
    %649 = vmatpush1.bf16.msra.mxu0 %v481
    %650 = vmatprep.subr.bf16.mxu0 %v486
    %651 = vmatpush1.bf16.msra.mxu0 %v485
    %652 = vmatprep.subr.bf16.mxu0 0
    %653 = vmatpush1.bf16.msra.mxu0 0
    %654 = vmatprep.subr.bf16.mxu0 0
    %655 = vmatpush1.bf16.msra.mxu0 0
    %656 = vmatprep.subr.bf16.mxu0 0
    %657 = vmatpush1.bf16.msra.mxu0 0
    %658 = vmatprep.subr.bf16.mxu0 0
    %659 = vmatpush1.bf16.msra.mxu0 0
    %660 = vmatprep.subr.bf16.mxu0 0
    %661 = vmatpush1.bf16.msra.mxu0 0
    %662 = vmatprep.subr.bf16.mxu0 0
    %663 = vmatpush1.bf16.msra.mxu0 0
    %664 = vmatprep.subr.bf16.mxu0 0
    %665 = vmatpush1.bf16.msra.mxu0 0
    %666 = vmatprep.subr.bf16.mxu0 0
    %667 = vmatpush1.bf16.msra.mxu0 0
    %668 = vmatprep.mubr.bf16.mxu0 0
    %669 = vmatmul.mubr.bf16.gmra.mrb[0].mxu0 %v635
    %v670 = vpop.f32.mrb[0].mxu0
    %v671 = vadd.f32 0.0, %v670
    %v672 = vpop.f32.mrb[0].mxu0
    %v673 = vadd.f32 0.0, %v672
    %v674 = vpop.f32.mrb[0].mxu0
    %v675 = vpop.f32.mrb[0].mxu0
    %676 = vdwg.mxu0
    %677 = vmatprep.subr.bf16.mxu0 %v460
    %678 = vmatpush1.bf16.msra.mxu0 %v459
    %679 = vmatprep.subr.bf16.mxu0 %v464
    %680 = vmatpush1.bf16.msra.mxu0 %v463
    %681 = vmatprep.subr.bf16.mxu0 %v468
    %682 = vmatpush1.bf16.msra.mxu0 %v467
    %683 = vmatprep.subr.bf16.mxu0 %v472
    %684 = vmatpush1.bf16.msra.mxu0 %v471
    %685 = vmatprep.subr.bf16.mxu0 %v476
    %686 = vmatpush1.bf16.msra.mxu0 %v475
    %687 = vmatprep.subr.bf16.mxu0 %v480
    %688 = vmatpush1.bf16.msra.mxu0 %v479
    %689 = vmatprep.subr.bf16.mxu0 %v484
    %690 = vmatpush1.bf16.msra.mxu0 %v483
    %691 = vmatprep.subr.bf16.mxu0 %v488
    %692 = vmatpush1.bf16.msra.mxu0 %v487
    %693 = vmatprep.subr.bf16.mxu0 0
    %694 = vmatpush1.bf16.msra.mxu0 0
    %695 = vmatprep.subr.bf16.mxu0 0
    %696 = vmatpush1.bf16.msra.mxu0 0
    %697 = vmatprep.subr.bf16.mxu0 0
    %698 = vmatpush1.bf16.msra.mxu0 0
    %699 = vmatprep.subr.bf16.mxu0 0
    %700 = vmatpush1.bf16.msra.mxu0 0
    %701 = vmatprep.subr.bf16.mxu0 0
    %702 = vmatpush1.bf16.msra.mxu0 0
    %703 = vmatprep.subr.bf16.mxu0 0
    %704 = vmatpush1.bf16.msra.mxu0 0
    %705 = vmatprep.subr.bf16.mxu0 0
    %706 = vmatpush1.bf16.msra.mxu0 0
    %707 = vmatprep.subr.bf16.mxu0 0
    %708 = vmatpush1.bf16.msra.mxu0 0
    %709 = vmatprep.mubr.bf16.mxu0 0
    %710 = vmatmul.mubr.bf16.gmra.mrb[0].mxu0 %v635
    %v711 = vpop.f32.mrb[0].mxu0
    %v712 = vadd.f32 0.0, %v711
    %v713 = vpop.f32.mrb[0].mxu0
    %v714 = vadd.f32 0.0, %v713
    %v715 = vpop.f32.mrb[0].mxu0
    %v716 = vpop.f32.mrb[0].mxu0
    %717 = vdwg.mxu0
    %v718 = vadd.f32 %v631, %v671
    %v719 = vadd.f32 %v632, %v673
    %v720 = vadd.f32 %v633, %v712
    %v721 = vadd.f32 %v634, %v714
    %v722 = vxor.u32 %v718, 2147483648
    %v723 = vxor.u32 %v719, 2147483648
    %v724 = vxor.u32 %v720, 2147483648
    %v725 = vmul.f32 %v722, 1.442695
    %v726 = vpow.pop %v725
    %v727 = vmul.f32 %v723, 1.442695
    %v728 = vpow.pop %v727
    %v729 = vmul.f32 %v724, 1.442695
    %v730 = vpow.pop %v729
    %v731 = vadd.f32 %v726, 1.0
    %v732 = vadd.f32 %v728, 1.0
    %v733 = vadd.f32 %v730, 1.0
    %v734 = vrcp.pop %v731
    %v735 = vmul.f32 1.0, %v734
    %v736 = vrcp.pop %v732
    %v737 = vmul.f32 1.0, %v736
    %v738 = vrcp.pop %v733
    %v739 = vmul.f32 1.0, %v738
    %v740 = vtanh.pop %v721
    %v741 = vmul.f32 %v737, %v628
    %v742 = vmul.f32 %v735, %v740
    %v743 = vadd.f32 %v741, %v742
    %v744 = vtanh.pop %v743
    %v745 = vmul.f32 %v739, %v744
    %v746 = vld [vmem:[#allocation2 + $0x40] sm:$0xff]
    %v747 = vld [vmem:[#allocation2 + $0x48] sm:$0xff]
    %v748 = vld [vmem:[#allocation2 + $0x50] sm:$0xff]
    %v749 = vld [vmem:[#allocation2 + $0x58] sm:$0xff]
    %v750 = vpack.c.bf16 %v745, %v745
    %751 = vmatprep.subr.bf16.mxu0 %v458
    %752 = vmatpush1.bf16.msra.mxu0 %v457
    %753 = vmatprep.subr.bf16.mxu0 %v462
    %754 = vmatpush1.bf16.msra.mxu0 %v461
    %755 = vmatprep.subr.bf16.mxu0 %v466
    %756 = vmatpush1.bf16.msra.mxu0 %v465
    %757 = vmatprep.subr.bf16.mxu0 %v470
    %758 = vmatpush1.bf16.msra.mxu0 %v469
    %759 = vmatprep.subr.bf16.mxu0 %v474
    %760 = vmatpush1.bf16.msra.mxu0 %v473
    %761 = vmatprep.subr.bf16.mxu0 %v478
    %762 = vmatpush1.bf16.msra.mxu0 %v477
    %763 = vmatprep.subr.bf16.mxu0 %v482
    %764 = vmatpush1.bf16.msra.mxu0 %v481
    %765 = vmatprep.subr.bf16.mxu0 %v486
    %766 = vmatpush1.bf16.msra.mxu0 %v485
    %767 = vmatprep.subr.bf16.mxu0 0
    %768 = vmatpush1.bf16.msra.mxu0 0
    %769 = vmatprep.subr.bf16.mxu0 0
    %770 = vmatpush1.bf16.msra.mxu0 0
    %771 = vmatprep.subr.bf16.mxu0 0
    %772 = vmatpush1.bf16.msra.mxu0 0
    %773 = vmatprep.subr.bf16.mxu0 0
    %774 = vmatpush1.bf16.msra.mxu0 0
    %775 = vmatprep.subr.bf16.mxu0 0
    %776 = vmatpush1.bf16.msra.mxu0 0
    %777 = vmatprep.subr.bf16.mxu0 0
    %778 = vmatpush1.bf16.msra.mxu0 0
    %779 = vmatprep.subr.bf16.mxu0 0
    %780 = vmatpush1.bf16.msra.mxu0 0
    %781 = vmatprep.subr.bf16.mxu0 0
    %782 = vmatpush1.bf16.msra.mxu0 0
    %783 = vmatprep.mubr.bf16.mxu0 0
    %784 = vmatmul.mubr.bf16.gmra.mrb[0].mxu0 %v750
    %v785 = vpop.f32.mrb[0].mxu0
    %v786 = vadd.f32 0.0, %v785
    %v787 = vpop.f32.mrb[0].mxu0
    %v788 = vadd.f32 0.0, %v787
    %v789 = vpop.f32.mrb[0].mxu0
    %v790 = vpop.f32.mrb[0].mxu0
    %791 = vdwg.mxu0
    %792 = vmatprep.subr.bf16.mxu0 %v460
    %793 = vmatpush1.bf16.msra.mxu0 %v459
    %794 = vmatprep.subr.bf16.mxu0 %v464
    %795 = vmatpush1.bf16.msra.mxu0 %v463
    %796 = vmatprep.subr.bf16.mxu0 %v468
    %797 = vmatpush1.bf16.msra.mxu0 %v467
    %798 = vmatprep.subr.bf16.mxu0 %v472
    %799 = vmatpush1.bf16.msra.mxu0 %v471
    %800 = vmatprep.subr.bf16.mxu0 %v476
    %801 = vmatpush1.bf16.msra.mxu0 %v475
    %802 = vmatprep.subr.bf16.mxu0 %v480
    %803 = vmatpush1.bf16.msra.mxu0 %v479
    %804 = vmatprep.subr.bf16.mxu0 %v484
    %805 = vmatpush1.bf16.msra.mxu0 %v483
    %806 = vmatprep.subr.bf16.mxu0 %v488
    %807 = vmatpush1.bf16.msra.mxu0 %v487
    %808 = vmatprep.subr.bf16.mxu0 0
    %809 = vmatpush1.bf16.msra.mxu0 0
    %810 = vmatprep.subr.bf16.mxu0 0
    %811 = vmatpush1.bf16.msra.mxu0 0
    %812 = vmatprep.subr.bf16.mxu0 0
    %813 = vmatpush1.bf16.msra.mxu0 0
    %814 = vmatprep.subr.bf16.mxu0 0
    %815 = vmatpush1.bf16.msra.mxu0 0
    %816 = vmatprep.subr.bf16.mxu0 0
    %817 = vmatpush1.bf16.msra.mxu0 0
    %818 = vmatprep.subr.bf16.mxu0 0
    %819 = vmatpush1.bf16.msra.mxu0 0
    %820 = vmatprep.subr.bf16.mxu0 0
    %821 = vmatpush1.bf16.msra.mxu0 0
    %822 = vmatprep.subr.bf16.mxu0 0
    %823 = vmatpush1.bf16.msra.mxu0 0
    %824 = vmatprep.mubr.bf16.mxu0 0
    %825 = vmatmul.mubr.bf16.gmra.mrb[0].mxu0 %v750
    %v826 = vpop.f32.mrb[0].mxu0
    %v827 = vadd.f32 0.0, %v826
    %v828 = vpop.f32.mrb[0].mxu0
    %v829 = vadd.f32 0.0, %v828
    %v830 = vpop.f32.mrb[0].mxu0
    %v831 = vpop.f32.mrb[0].mxu0
    %832 = vdwg.mxu0
    %v833 = vadd.f32 %v746, %v786
    %v834 = vadd.f32 %v747, %v788
    %v835 = vadd.f32 %v748, %v827
    %v836 = vadd.f32 %v749, %v829
    %v837 = vxor.u32 %v833, 2147483648
    %v838 = vxor.u32 %v834, 2147483648
    %v839 = vxor.u32 %v835, 2147483648
    %v840 = vmul.f32 %v837, 1.442695
    %v841 = vpow.pop %v840
    %v842 = vmul.f32 %v838, 1.442695
    %v843 = vpow.pop %v842
    %v844 = vmul.f32 %v839, 1.442695
    %v845 = vpow.pop %v844
    %v846 = vadd.f32 %v841, 1.0
    %v847 = vadd.f32 %v843, 1.0
    %v848 = vadd.f32 %v845, 1.0
    %v849 = vrcp.pop %v846
    %v850 = vmul.f32 1.0, %v849
    %v851 = vrcp.pop %v847
    %v852 = vmul.f32 1.0, %v851
    %v853 = vrcp.pop %v848
    %v854 = vmul.f32 1.0, %v853
    %v855 = vtanh.pop %v836
    %v856 = vmul.f32 %v852, %v743
    %v857 = vmul.f32 %v850, %v855
    %v858 = vadd.f32 %v856, %v857
    %v859 = vtanh.pop %v858
    %v860 = vmul.f32 %v854, %v859
    %v861 = vld [vmem:[#allocation2 + $0x60] sm:$0xff]
    %v862 = vld [vmem:[#allocation2 + $0x68] sm:$0xff]
    %v863 = vld [vmem:[#allocation2 + $0x70] sm:$0xff]
    %v864 = vld [vmem:[#allocation2 + $0x78] sm:$0xff]
    %v865 = vpack.c.bf16 %v860, %v860
    %866 = vmatprep.subr.bf16.mxu0 %v458
    %867 = vmatpush1.bf16.msra.mxu0 %v457
    %868 = vmatprep.subr.bf16.mxu0 %v462
    %869 = vmatpush1.bf16.msra.mxu0 %v461
    %870 = vmatprep.subr.bf16.mxu0 %v466
    %871 = vmatpush1.bf16.msra.mxu0 %v465
    %872 = vmatprep.subr.bf16.mxu0 %v470
    %873 = vmatpush1.bf16.msra.mxu0 %v469
    %874 = vmatprep.subr.bf16.mxu0 %v474
    %875 = vmatpush1.bf16.msra.mxu0 %v473
    %876 = vmatprep.subr.bf16.mxu0 %v478
    %877 = vmatpush1.bf16.msra.mxu0 %v477
    %878 = vmatprep.subr.bf16.mxu0 %v482
    %879 = vmatpush1.bf16.msra.mxu0 %v481
    %880 = vmatprep.subr.bf16.mxu0 %v486
    %881 = vmatpush1.bf16.msra.mxu0 %v485
    %882 = vmatprep.subr.bf16.mxu0 0
    %883 = vmatpush1.bf16.msra.mxu0 0
    %884 = vmatprep.subr.bf16.mxu0 0
    %885 = vmatpush1.bf16.msra.mxu0 0
    %886 = vmatprep.subr.bf16.mxu0 0
    %887 = vmatpush1.bf16.msra.mxu0 0
    %888 = vmatprep.subr.bf16.mxu0 0
    %889 = vmatpush1.bf16.msra.mxu0 0
    %890 = vmatprep.subr.bf16.mxu0 0
    %891 = vmatpush1.bf16.msra.mxu0 0
    %892 = vmatprep.subr.bf16.mxu0 0
    %893 = vmatpush1.bf16.msra.mxu0 0
    %894 = vmatprep.subr.bf16.mxu0 0
    %895 = vmatpush1.bf16.msra.mxu0 0
    %896 = vmatprep.subr.bf16.mxu0 0
    %897 = vmatpush1.bf16.msra.mxu0 0
    %898 = vmatprep.mubr.bf16.mxu0 0
    %899 = vmatmul.mubr.bf16.gmra.mrb[0].mxu0 %v865
    %v900 = vpop.f32.mrb[0].mxu0
    %v901 = vadd.f32 0.0, %v900
    %v902 = vpop.f32.mrb[0].mxu0
    %v903 = vadd.f32 0.0, %v902
    %v904 = vpop.f32.mrb[0].mxu0
    %v905 = vpop.f32.mrb[0].mxu0
    %906 = vdwg.mxu0
    %907 = vmatprep.subr.bf16.mxu0 %v460
    %908 = vmatpush1.bf16.msra.mxu0 %v459
    %909 = vmatprep.subr.bf16.mxu0 %v464
    %910 = vmatpush1.bf16.msra.mxu0 %v463
    %911 = vmatprep.subr.bf16.mxu0 %v468
    %912 = vmatpush1.bf16.msra.mxu0 %v467
    %913 = vmatprep.subr.bf16.mxu0 %v472
    %914 = vmatpush1.bf16.msra.mxu0 %v471
    %915 = vmatprep.subr.bf16.mxu0 %v476
    %916 = vmatpush1.bf16.msra.mxu0 %v475
    %917 = vmatprep.subr.bf16.mxu0 %v480
    %918 = vmatpush1.bf16.msra.mxu0 %v479
    %919 = vmatprep.subr.bf16.mxu0 %v484
    %920 = vmatpush1.bf16.msra.mxu0 %v483
    %921 = vmatprep.subr.bf16.mxu0 %v488
    %922 = vmatpush1.bf16.msra.mxu0 %v487
    %923 = vmatprep.subr.bf16.mxu0 0
    %924 = vmatpush1.bf16.msra.mxu0 0
    %925 = vmatprep.subr.bf16.mxu0 0
    %926 = vmatpush1.bf16.msra.mxu0 0
    %927 = vmatprep.subr.bf16.mxu0 0
    %928 = vmatpush1.bf16.msra.mxu0 0
    %929 = vmatprep.subr.bf16.mxu0 0
    %930 = vmatpush1.bf16.msra.mxu0 0
    %931 = vmatprep.subr.bf16.mxu0 0
    %932 = vmatpush1.bf16.msra.mxu0 0
    %933 = vmatprep.subr.bf16.mxu0 0
    %934 = vmatpush1.bf16.msra.mxu0 0
    %935 = vmatprep.subr.bf16.mxu0 0
    %936 = vmatpush1.bf16.msra.mxu0 0
    %937 = vmatprep.subr.bf16.mxu0 0
    %938 = vmatpush1.bf16.msra.mxu0 0
    %939 = vmatprep.mubr.bf16.mxu0 0
    %940 = vmatmul.mubr.bf16.gmra.mrb[0].mxu0 %v865
    %v941 = vpop.f32.mrb[0].mxu0
    %v942 = vadd.f32 0.0, %v941
    %v943 = vpop.f32.mrb[0].mxu0
    %v944 = vadd.f32 0.0, %v943
    %v945 = vpop.f32.mrb[0].mxu0
    %v946 = vpop.f32.mrb[0].mxu0
    %947 = vdwg.mxu0
    %v948 = vadd.f32 %v861, %v901
    %v949 = vadd.f32 %v862, %v903
    %v950 = vadd.f32 %v863, %v942
    %v951 = vadd.f32 %v864, %v944
    %v952 = vxor.u32 %v948, 2147483648
    %v953 = vxor.u32 %v949, 2147483648
    %v954 = vxor.u32 %v950, 2147483648
    %v955 = vmul.f32 %v952, 1.442695
    %v956 = vpow.pop %v955
    %v957 = vmul.f32 %v953, 1.442695
    %v958 = vpow.pop %v957
    %v959 = vmul.f32 %v954, 1.442695
    %v960 = vpow.pop %v959
    %v961 = vadd.f32 %v956, 1.0
    %v962 = vadd.f32 %v958, 1.0
    %v963 = vadd.f32 %v960, 1.0
    %v964 = vrcp.pop %v961
    %v965 = vmul.f32 1.0, %v964
    %v966 = vrcp.pop %v962
    %v967 = vmul.f32 1.0, %v966
    %v968 = vrcp.pop %v963
    %v969 = vmul.f32 1.0, %v968
    %v970 = vtanh.pop %v951
    %v971 = vmul.f32 %v967, %v858
    %v972 = vmul.f32 %v965, %v970
    %v973 = vadd.f32 %v971, %v972
    %v974 = vtanh.pop %v973
    %v975 = vmul.f32 %v969, %v974
    %v976 = vld [vmem:[#allocation2 + $0x80] sm:$0xff]
    %v977 = vld [vmem:[#allocation2 + $0x88] sm:$0xff]
    %v978 = vld [vmem:[#allocation2 + $0x90] sm:$0xff]
    %v979 = vld [vmem:[#allocation2 + $0x98] sm:$0xff]
    %v980 = vpack.c.bf16 %v975, %v975
    %981 = vmatprep.subr.bf16.mxu0 %v458
    %982 = vmatpush1.bf16.msra.mxu0 %v457
    %983 = vmatprep.subr.bf16.mxu0 %v462
    %984 = vmatpush1.bf16.msra.mxu0 %v461
    %985 = vmatprep.subr.bf16.mxu0 %v466
    %986 = vmatpush1.bf16.msra.mxu0 %v465
    %987 = vmatprep.subr.bf16.mxu0 %v470
    %988 = vmatpush1.bf16.msra.mxu0 %v469
    %989 = vmatprep.subr.bf16.mxu0 %v474
    %990 = vmatpush1.bf16.msra.mxu0 %v473
    %991 = vmatprep.subr.bf16.mxu0 %v478
    %992 = vmatpush1.bf16.msra.mxu0 %v477
    %993 = vmatprep.subr.bf16.mxu0 %v482
    %994 = vmatpush1.bf16.msra.mxu0 %v481
    %995 = vmatprep.subr.bf16.mxu0 %v486
    %996 = vmatpush1.bf16.msra.mxu0 %v485
    %997 = vmatprep.subr.bf16.mxu0 0
    %998 = vmatpush1.bf16.msra.mxu0 0
    %999 = vmatprep.subr.bf16.mxu0 0
    %1000 = vmatpush1.bf16.msra.mxu0 0
    %1001 = vmatprep.subr.bf16.mxu0 0
    %1002 = vmatpush1.bf16.msra.mxu0 0
    %1003 = vmatprep.subr.bf16.mxu0 0
    %1004 = vmatpush1.bf16.msra.mxu0 0
    %1005 = vmatprep.subr.bf16.mxu0 0
    %1006 = vmatpush1.bf16.msra.mxu0 0
    %1007 = vmatprep.subr.bf16.mxu0 0
    %1008 = vmatpush1.bf16.msra.mxu0 0
    %1009 = vmatprep.subr.bf16.mxu0 0
    %1010 = vmatpush1.bf16.msra.mxu0 0
    %1011 = vmatprep.subr.bf16.mxu0 0
    %1012 = vmatpush1.bf16.msra.mxu0 0
    %1013 = vmatprep.mubr.bf16.mxu0 0
    %1014 = vmatmul.mubr.bf16.gmra.mrb[0].mxu0 %v980
    %v1015 = vpop.f32.mrb[0].mxu0
    %v1016 = vadd.f32 0.0, %v1015
    %v1017 = vpop.f32.mrb[0].mxu0
    %v1018 = vadd.f32 0.0, %v1017
    %v1019 = vpop.f32.mrb[0].mxu0
    %v1020 = vpop.f32.mrb[0].mxu0
    %1021 = vdwg.mxu0
    %1022 = vmatprep.subr.bf16.mxu0 %v460
    %1023 = vmatpush1.bf16.msra.mxu0 %v459
    %1024 = vmatprep.subr.bf16.mxu0 %v464
    %1025 = vmatpush1.bf16.msra.mxu0 %v463
    %1026 = vmatprep.subr.bf16.mxu0 %v468
    %1027 = vmatpush1.bf16.msra.mxu0 %v467
    %1028 = vmatprep.subr.bf16.mxu0 %v472
    %1029 = vmatpush1.bf16.msra.mxu0 %v471
    %1030 = vmatprep.subr.bf16.mxu0 %v476
    %1031 = vmatpush1.bf16.msra.mxu0 %v475
    %1032 = vmatprep.subr.bf16.mxu0 %v480
    %1033 = vmatpush1.bf16.msra.mxu0 %v479
    %1034 = vmatprep.subr.bf16.mxu0 %v484
    %1035 = vmatpush1.bf16.msra.mxu0 %v483
    %1036 = vmatprep.subr.bf16.mxu0 %v488
    %1037 = vmatpush1.bf16.msra.mxu0 %v487
    %1038 = vmatprep.subr.bf16.mxu0 0
    %1039 = vmatpush1.bf16.msra.mxu0 0
    %1040 = vmatprep.subr.bf16.mxu0 0
    %1041 = vmatpush1.bf16.msra.mxu0 0
    %1042 = vmatprep.subr.bf16.mxu0 0
    %1043 = vmatpush1.bf16.msra.mxu0 0
    %1044 = vmatprep.subr.bf16.mxu0 0
    %1045 = vmatpush1.bf16.msra.mxu0 0
    %1046 = vmatprep.subr.bf16.mxu0 0
    %1047 = vmatpush1.bf16.msra.mxu0 0
    %1048 = vmatprep.subr.bf16.mxu0 0
    %1049 = vmatpush1.bf16.msra.mxu0 0
    %1050 = vmatprep.subr.bf16.mxu0 0
    %1051 = vmatpush1.bf16.msra.mxu0 0
    %1052 = vmatprep.subr.bf16.mxu0 0
    %1053 = vmatpush1.bf16.msra.mxu0 0
    %1054 = vmatprep.mubr.bf16.mxu0 0
    %1055 = vmatmul.mubr.bf16.gmra.mrb[0].mxu0 %v980
    %v1056 = vpop.f32.mrb[0].mxu0
    %v1057 = vadd.f32 0.0, %v1056
    %v1058 = vpop.f32.mrb[0].mxu0
    %v1059 = vadd.f32 0.0, %v1058
    %v1060 = vpop.f32.mrb[0].mxu0
    %v1061 = vpop.f32.mrb[0].mxu0
    %1062 = vdwg.mxu0
    %v1063 = vadd.f32 %v976, %v1016
    %v1064 = vadd.f32 %v977, %v1018
    %v1065 = vadd.f32 %v978, %v1057
    %v1066 = vadd.f32 %v979, %v1059
    %v1067 = vxor.u32 %v1063, 2147483648
    %v1068 = vxor.u32 %v1064, 2147483648
    %v1069 = vxor.u32 %v1065, 2147483648
    %v1070 = vmul.f32 %v1067, 1.442695
    %v1071 = vpow.pop %v1070
    %v1072 = vmul.f32 %v1068, 1.442695
    %v1073 = vpow.pop %v1072
    %v1074 = vmul.f32 %v1069, 1.442695
    %v1075 = vpow.pop %v1074
    %v1076 = vadd.f32 %v1071, 1.0
    %v1077 = vadd.f32 %v1073, 1.0
    %v1078 = vadd.f32 %v1075, 1.0
    %v1079 = vrcp.pop %v1076
    %v1080 = vmul.f32 1.0, %v1079
    %v1081 = vrcp.pop %v1077
    %v1082 = vmul.f32 1.0, %v1081
    %v1083 = vrcp.pop %v1078
    %v1084 = vmul.f32 1.0, %v1083
    %v1085 = vtanh.pop %v1066
    %v1086 = vmul.f32 %v1082, %v973
    %v1087 = vmul.f32 %v1080, %v1085
    %v1088 = vadd.f32 %v1086, %v1087
    %v1089 = vtanh.pop %v1088
    %v1090 = vmul.f32 %v1084, %v1089
    %v1091 = vld [vmem:[#allocation2 + $0xa0] sm:$0xff]
    %v1092 = vld [vmem:[#allocation2 + $0xa8] sm:$0xff]
    %v1093 = vld [vmem:[#allocation2 + $0xb0] sm:$0xff]
    %v1094 = vld [vmem:[#allocation2 + $0xb8] sm:$0xff]
    %v1095 = vpack.c.bf16 %v1090, %v1090
    %1096 = vmatprep.subr.bf16.mxu0 %v458
    %1097 = vmatpush1.bf16.msra.mxu0 %v457
    %1098 = vmatprep.subr.bf16.mxu0 %v462
    %1099 = vmatpush1.bf16.msra.mxu0 %v461
    %1100 = vmatprep.subr.bf16.mxu0 %v466
    %1101 = vmatpush1.bf16.msra.mxu0 %v465
    %1102 = vmatprep.subr.bf16.mxu0 %v470
    %1103 = vmatpush1.bf16.msra.mxu0 %v469
    %1104 = vmatprep.subr.bf16.mxu0 %v474
    %1105 = vmatpush1.bf16.msra.mxu0 %v473
    %1106 = vmatprep.subr.bf16.mxu0 %v478
    %1107 = vmatpush1.bf16.msra.mxu0 %v477
    %1108 = vmatprep.subr.bf16.mxu0 %v482
    %1109 = vmatpush1.bf16.msra.mxu0 %v481
    %1110 = vmatprep.subr.bf16.mxu0 %v486
    %1111 = vmatpush1.bf16.msra.mxu0 %v485
    %1112 = vmatprep.subr.bf16.mxu0 0
    %1113 = vmatpush1.bf16.msra.mxu0 0
    %1114 = vmatprep.subr.bf16.mxu0 0
    %1115 = vmatpush1.bf16.msra.mxu0 0
    %1116 = vmatprep.subr.bf16.mxu0 0
    %1117 = vmatpush1.bf16.msra.mxu0 0
    %1118 = vmatprep.subr.bf16.mxu0 0
    %1119 = vmatpush1.bf16.msra.mxu0 0
    %1120 = vmatprep.subr.bf16.mxu0 0
    %1121 = vmatpush1.bf16.msra.mxu0 0
    %1122 = vmatprep.subr.bf16.mxu0 0
    %1123 = vmatpush1.bf16.msra.mxu0 0
    %1124 = vmatprep.subr.bf16.mxu0 0
    %1125 = vmatpush1.bf16.msra.mxu0 0
    %1126 = vmatprep.subr.bf16.mxu0 0
    %1127 = vmatpush1.bf16.msra.mxu0 0
    %1128 = vmatprep.mubr.bf16.mxu0 0
    %1129 = vmatmul.mubr.bf16.gmra.mrb[0].mxu0 %v1095
    %v1130 = vpop.f32.mrb[0].mxu0
    %v1131 = vadd.f32 0.0, %v1130
    %v1132 = vpop.f32.mrb[0].mxu0
    %v1133 = vadd.f32 0.0, %v1132
    %v1134 = vpop.f32.mrb[0].mxu0
    %v1135 = vpop.f32.mrb[0].mxu0
    %1136 = vdwg.mxu0
    %1137 = vmatprep.subr.bf16.mxu0 %v460
    %1138 = vmatpush1.bf16.msra.mxu0 %v459
    %1139 = vmatprep.subr.bf16.mxu0 %v464
    %1140 = vmatpush1.bf16.msra.mxu0 %v463
    %1141 = vmatprep.subr.bf16.mxu0 %v468
    %1142 = vmatpush1.bf16.msra.mxu0 %v467
    %1143 = vmatprep.subr.bf16.mxu0 %v472
    %1144 = vmatpush1.bf16.msra.mxu0 %v471
    %1145 = vmatprep.subr.bf16.mxu0 %v476
    %1146 = vmatpush1.bf16.msra.mxu0 %v475
    %1147 = vmatprep.subr.bf16.mxu0 %v480
    %1148 = vmatpush1.bf16.msra.mxu0 %v479
    %1149 = vmatprep.subr.bf16.mxu0 %v484
    %1150 = vmatpush1.bf16.msra.mxu0 %v483
    %1151 = vmatprep.subr.bf16.mxu0 %v488
    %1152 = vmatpush1.bf16.msra.mxu0 %v487
    %1153 = vmatprep.subr.bf16.mxu0 0
    %1154 = vmatpush1.bf16.msra.mxu0 0
    %1155 = vmatprep.subr.bf16.mxu0 0
    %1156 = vmatpush1.bf16.msra.mxu0 0
    %1157 = vmatprep.subr.bf16.mxu0 0
    %1158 = vmatpush1.bf16.msra.mxu0 0
    %1159 = vmatprep.subr.bf16.mxu0 0
    %1160 = vmatpush1.bf16.msra.mxu0 0
    %1161 = vmatprep.subr.bf16.mxu0 0
    %1162 = vmatpush1.bf16.msra.mxu0 0
    %1163 = vmatprep.subr.bf16.mxu0 0
    %1164 = vmatpush1.bf16.msra.mxu0 0
    %1165 = vmatprep.subr.bf16.mxu0 0
    %1166 = vmatpush1.bf16.msra.mxu0 0
    %1167 = vmatprep.subr.bf16.mxu0 0
    %1168 = vmatpush1.bf16.msra.mxu0 0
    %1169 = vmatprep.mubr.bf16.mxu0 0
    %1170 = vmatmul.mubr.bf16.gmra.mrb[0].mxu0 %v1095
    %v1171 = vpop.f32.mrb[0].mxu0
    %v1172 = vadd.f32 0.0, %v1171
    %v1173 = vpop.f32.mrb[0].mxu0
    %v1174 = vadd.f32 0.0, %v1173
    %v1175 = vpop.f32.mrb[0].mxu0
    %v1176 = vpop.f32.mrb[0].mxu0
    %1177 = vdwg.mxu0
    %v1178 = vadd.f32 %v1091, %v1131
    %v1179 = vadd.f32 %v1092, %v1133
    %v1180 = vadd.f32 %v1093, %v1172
    %v1181 = vadd.f32 %v1094, %v1174
    %v1182 = vxor.u32 %v1178, 2147483648
    %v1183 = vxor.u32 %v1179, 2147483648
    %v1184 = vxor.u32 %v1180, 2147483648
    %v1185 = vmul.f32 %v1182, 1.442695
    %v1186 = vpow.pop %v1185
    %v1187 = vmul.f32 %v1183, 1.442695
    %v1188 = vpow.pop %v1187
    %v1189 = vmul.f32 %v1184, 1.442695
    %v1190 = vpow.pop %v1189
    %v1191 = vadd.f32 %v1186, 1.0
    %v1192 = vadd.f32 %v1188, 1.0
    %v1193 = vadd.f32 %v1190, 1.0
    %v1194 = vrcp.pop %v1191
    %v1195 = vmul.f32 1.0, %v1194
    %v1196 = vrcp.pop %v1192
    %v1197 = vmul.f32 1.0, %v1196
    %v1198 = vrcp.pop %v1193
    %v1199 = vmul.f32 1.0, %v1198
    %v1200 = vtanh.pop %v1181
    %v1201 = vmul.f32 %v1197, %v1088
    %v1202 = vmul.f32 %v1195, %v1200
    %v1203 = vadd.f32 %v1201, %v1202
    %v1204 = vtanh.pop %v1203
    %v1205 = vmul.f32 %v1199, %v1204
    %v1206 = vld [vmem:[#allocation2 + $0xc0] sm:$0xff]
    %v1207 = vld [vmem:[#allocation2 + $0xc8] sm:$0xff]
    %v1208 = vld [vmem:[#allocation2 + $0xd0] sm:$0xff]
    %v1209 = vld [vmem:[#allocation2 + $0xd8] sm:$0xff]
    %v1210 = vpack.c.bf16 %v1205, %v1205
    %1211 = vmatprep.subr.bf16.mxu0 %v458
    %1212 = vmatpush1.bf16.msra.mxu0 %v457
    %1213 = vmatprep.subr.bf16.mxu0 %v462
    %1214 = vmatpush1.bf16.msra.mxu0 %v461
    %1215 = vmatprep.subr.bf16.mxu0 %v466
    %1216 = vmatpush1.bf16.msra.mxu0 %v465
    %1217 = vmatprep.subr.bf16.mxu0 %v470
    %1218 = vmatpush1.bf16.msra.mxu0 %v469
    %1219 = vmatprep.subr.bf16.mxu0 %v474
    %1220 = vmatpush1.bf16.msra.mxu0 %v473
    %1221 = vmatprep.subr.bf16.mxu0 %v478
    %1222 = vmatpush1.bf16.msra.mxu0 %v477
    %1223 = vmatprep.subr.bf16.mxu0 %v482
    %1224 = vmatpush1.bf16.msra.mxu0 %v481
    %1225 = vmatprep.subr.bf16.mxu0 %v486
    %1226 = vmatpush1.bf16.msra.mxu0 %v485
    %1227 = vmatprep.subr.bf16.mxu0 0
    %1228 = vmatpush1.bf16.msra.mxu0 0
    %1229 = vmatprep.subr.bf16.mxu0 0
    %1230 = vmatpush1.bf16.msra.mxu0 0
    %1231 = vmatprep.subr.bf16.mxu0 0
    %1232 = vmatpush1.bf16.msra.mxu0 0
    %1233 = vmatprep.subr.bf16.mxu0 0
    %1234 = vmatpush1.bf16.msra.mxu0 0
    %1235 = vmatprep.subr.bf16.mxu0 0
    %1236 = vmatpush1.bf16.msra.mxu0 0
    %1237 = vmatprep.subr.bf16.mxu0 0
    %1238 = vmatpush1.bf16.msra.mxu0 0
    %1239 = vmatprep.subr.bf16.mxu0 0
    %1240 = vmatpush1.bf16.msra.mxu0 0
    %1241 = vmatprep.subr.bf16.mxu0 0
    %1242 = vmatpush1.bf16.msra.mxu0 0
    %1243 = vmatprep.mubr.bf16.mxu0 0
    %1244 = vmatmul.mubr.bf16.gmra.mrb[0].mxu0 %v1210
    %v1245 = vpop.f32.mrb[0].mxu0
    %v1246 = vadd.f32 0.0, %v1245
    %v1247 = vpop.f32.mrb[0].mxu0
    %v1248 = vadd.f32 0.0, %v1247
    %v1249 = vpop.f32.mrb[0].mxu0
    %v1250 = vpop.f32.mrb[0].mxu0
    %1251 = vdwg.mxu0
    %1252 = vmatprep.subr.bf16.mxu0 %v460
    %1253 = vmatpush1.bf16.msra.mxu0 %v459
    %1254 = vmatprep.subr.bf16.mxu0 %v464
    %1255 = vmatpush1.bf16.msra.mxu0 %v463
    %1256 = vmatprep.subr.bf16.mxu0 %v468
    %1257 = vmatpush1.bf16.msra.mxu0 %v467
    %1258 = vmatprep.subr.bf16.mxu0 %v472
    %1259 = vmatpush1.bf16.msra.mxu0 %v471
    %1260 = vmatprep.subr.bf16.mxu0 %v476
    %1261 = vmatpush1.bf16.msra.mxu0 %v475
    %1262 = vmatprep.subr.bf16.mxu0 %v480
    %1263 = vmatpush1.bf16.msra.mxu0 %v479
    %1264 = vmatprep.subr.bf16.mxu0 %v484
    %1265 = vmatpush1.bf16.msra.mxu0 %v483
    %1266 = vmatprep.subr.bf16.mxu0 %v488
    %1267 = vmatpush1.bf16.msra.mxu0 %v487
    %1268 = vmatprep.subr.bf16.mxu0 0
    %1269 = vmatpush1.bf16.msra.mxu0 0
    %1270 = vmatprep.subr.bf16.mxu0 0
    %1271 = vmatpush1.bf16.msra.mxu0 0
    %1272 = vmatprep.subr.bf16.mxu0 0
    %1273 = vmatpush1.bf16.msra.mxu0 0
    %1274 = vmatprep.subr.bf16.mxu0 0
    %1275 = vmatpush1.bf16.msra.mxu0 0
    %1276 = vmatprep.subr.bf16.mxu0 0
    %1277 = vmatpush1.bf16.msra.mxu0 0
    %1278 = vmatprep.subr.bf16.mxu0 0
    %1279 = vmatpush1.bf16.msra.mxu0 0
    %1280 = vmatprep.subr.bf16.mxu0 0
    %1281 = vmatpush1.bf16.msra.mxu0 0
    %1282 = vmatprep.subr.bf16.mxu0 0
    %1283 = vmatpush1.bf16.msra.mxu0 0
    %1284 = vmatprep.mubr.bf16.mxu0 0
    %1285 = vmatmul.mubr.bf16.gmra.mrb[0].mxu0 %v1210
    %v1286 = vpop.f32.mrb[0].mxu0
    %v1287 = vadd.f32 0.0, %v1286
    %v1288 = vpop.f32.mrb[0].mxu0
    %v1289 = vadd.f32 0.0, %v1288
    %v1290 = vpop.f32.mrb[0].mxu0
    %v1291 = vpop.f32.mrb[0].mxu0
    %1292 = vdwg.mxu0
    %v1293 = vadd.f32 %v1206, %v1246
    %v1294 = vadd.f32 %v1207, %v1248
    %v1295 = vadd.f32 %v1208, %v1287
    %v1296 = vadd.f32 %v1209, %v1289
    %v1297 = vxor.u32 %v1293, 2147483648
    %v1298 = vxor.u32 %v1294, 2147483648
    %v1299 = vxor.u32 %v1295, 2147483648
    %v1300 = vmul.f32 %v1297, 1.442695
    %v1301 = vpow.pop %v1300
    %v1302 = vmul.f32 %v1298, 1.442695
    %v1303 = vpow.pop %v1302
    %v1304 = vmul.f32 %v1299, 1.442695
    %v1305 = vpow.pop %v1304
    %v1306 = vadd.f32 %v1301, 1.0
    %v1307 = vadd.f32 %v1303, 1.0
    %v1308 = vadd.f32 %v1305, 1.0
    %v1309 = vrcp.pop %v1306
    %v1310 = vmul.f32 1.0, %v1309
    %v1311 = vrcp.pop %v1307
    %v1312 = vmul.f32 1.0, %v1311
    %v1313 = vrcp.pop %v1308
    %v1314 = vmul.f32 1.0, %v1313
    %v1315 = vtanh.pop %v1296
    %v1316 = vmul.f32 %v1312, %v1203
    %v1317 = vmul.f32 %v1310, %v1315
    %v1318 = vadd.f32 %v1316, %v1317
    %v1319 = vtanh.pop %v1318
    %v1320 = vmul.f32 %v1314, %v1319
    %v1321 = vld [vmem:[#allocation2 + $0xe0] sm:$0xff]
    %v1322 = vld [vmem:[#allocation2 + $0xe8] sm:$0xff]
    %v1323 = vld [vmem:[#allocation2 + $0xf0] sm:$0xff]
    %v1324 = vld [vmem:[#allocation2 + $0xf8] sm:$0xff]
    %v1325 = vpack.c.bf16 %v1320, %v1320
    %1326 = vmatprep.subr.bf16.mxu0 %v458
    %1327 = vmatpush1.bf16.msra.mxu0 %v457
    %1328 = vmatprep.subr.bf16.mxu0 %v462
    %1329 = vmatpush1.bf16.msra.mxu0 %v461
    %1330 = vmatprep.subr.bf16.mxu0 %v466
    %1331 = vmatpush1.bf16.msra.mxu0 %v465
    %1332 = vmatprep.subr.bf16.mxu0 %v470
    %1333 = vmatpush1.bf16.msra.mxu0 %v469
    %1334 = vmatprep.subr.bf16.mxu0 %v474
    %1335 = vmatpush1.bf16.msra.mxu0 %v473
    %1336 = vmatprep.subr.bf16.mxu0 %v478
    %1337 = vmatpush1.bf16.msra.mxu0 %v477
    %1338 = vmatprep.subr.bf16.mxu0 %v482
    %1339 = vmatpush1.bf16.msra.mxu0 %v481
    %1340 = vmatprep.subr.bf16.mxu0 %v486
    %1341 = vmatpush1.bf16.msra.mxu0 %v485
    %1342 = vmatprep.subr.bf16.mxu0 0
    %1343 = vmatpush1.bf16.msra.mxu0 0
    %1344 = vmatprep.subr.bf16.mxu0 0
    %1345 = vmatpush1.bf16.msra.mxu0 0
    %1346 = vmatprep.subr.bf16.mxu0 0
    %1347 = vmatpush1.bf16.msra.mxu0 0
    %1348 = vmatprep.subr.bf16.mxu0 0
    %1349 = vmatpush1.bf16.msra.mxu0 0
    %1350 = vmatprep.subr.bf16.mxu0 0
    %1351 = vmatpush1.bf16.msra.mxu0 0
    %1352 = vmatprep.subr.bf16.mxu0 0
    %1353 = vmatpush1.bf16.msra.mxu0 0
    %1354 = vmatprep.subr.bf16.mxu0 0
    %1355 = vmatpush1.bf16.msra.mxu0 0
    %1356 = vmatprep.subr.bf16.mxu0 0
    %1357 = vmatpush1.bf16.msra.mxu0 0
    %1358 = vmatprep.mubr.bf16.mxu0 0
    %1359 = vmatmul.mubr.bf16.gmra.mrb[0].mxu0 %v1325
    %v1360 = vpop.f32.mrb[0].mxu0
    %v1361 = vadd.f32 0.0, %v1360
    %v1362 = vpop.f32.mrb[0].mxu0
    %v1363 = vadd.f32 0.0, %v1362
    %v1364 = vpop.f32.mrb[0].mxu0
    %v1365 = vpop.f32.mrb[0].mxu0
    %1366 = vdwg.mxu0
    %1367 = vmatprep.subr.bf16.mxu0 %v460
    %1368 = vmatpush1.bf16.msra.mxu0 %v459
    %1369 = vmatprep.subr.bf16.mxu0 %v464
    %1370 = vmatpush1.bf16.msra.mxu0 %v463
    %1371 = vmatprep.subr.bf16.mxu0 %v468
    %1372 = vmatpush1.bf16.msra.mxu0 %v467
    %1373 = vmatprep.subr.bf16.mxu0 %v472
    %1374 = vmatpush1.bf16.msra.mxu0 %v471
    %1375 = vmatprep.subr.bf16.mxu0 %v476
    %1376 = vmatpush1.bf16.msra.mxu0 %v475
    %1377 = vmatprep.subr.bf16.mxu0 %v480
    %1378 = vmatpush1.bf16.msra.mxu0 %v479
    %1379 = vmatprep.subr.bf16.mxu0 %v484
    %1380 = vmatpush1.bf16.msra.mxu0 %v483
    %1381 = vmatprep.subr.bf16.mxu0 %v488
    %1382 = vmatpush1.bf16.msra.mxu0 %v487
    %1383 = vmatprep.subr.bf16.mxu0 0
    %1384 = vmatpush1.bf16.msra.mxu0 0
    %1385 = vmatprep.subr.bf16.mxu0 0
    %1386 = vmatpush1.bf16.msra.mxu0 0
    %1387 = vmatprep.subr.bf16.mxu0 0
    %1388 = vmatpush1.bf16.msra.mxu0 0
    %1389 = vmatprep.subr.bf16.mxu0 0
    %1390 = vmatpush1.bf16.msra.mxu0 0
    %1391 = vmatprep.subr.bf16.mxu0 0
    %1392 = vmatpush1.bf16.msra.mxu0 0
    %1393 = vmatprep.subr.bf16.mxu0 0
    %1394 = vmatpush1.bf16.msra.mxu0 0
    %1395 = vmatprep.subr.bf16.mxu0 0
    %1396 = vmatpush1.bf16.msra.mxu0 0
    %1397 = vmatprep.subr.bf16.mxu0 0
    %1398 = vmatpush1.bf16.msra.mxu0 0
    %1399 = vmatprep.mubr.bf16.mxu0 0
    %1400 = vmatmul.mubr.bf16.gmra.mrb[0].mxu0 %v1325
    %v1401 = vpop.f32.mrb[0].mxu0
    %v1402 = vadd.f32 0.0, %v1401
    %v1403 = vpop.f32.mrb[0].mxu0
    %v1404 = vadd.f32 0.0, %v1403
    %v1405 = vpop.f32.mrb[0].mxu0
    %v1406 = vpop.f32.mrb[0].mxu0
    %1407 = vdwg.mxu0
    %v1408 = vadd.f32 %v1321, %v1361
    %v1409 = vadd.f32 %v1322, %v1363
    %v1410 = vadd.f32 %v1323, %v1402
    %v1411 = vadd.f32 %v1324, %v1404
    %v1412 = vxor.u32 %v1408, 2147483648
    %v1413 = vxor.u32 %v1409, 2147483648
    %v1414 = vxor.u32 %v1410, 2147483648
    %v1415 = vmul.f32 %v1412, 1.442695
    %v1416 = vpow.pop %v1415
    %v1417 = vmul.f32 %v1413, 1.442695
    %v1418 = vpow.pop %v1417
    %v1419 = vmul.f32 %v1414, 1.442695
    %v1420 = vpow.pop %v1419
    %v1421 = vadd.f32 %v1416, 1.0
    %v1422 = vadd.f32 %v1418, 1.0
    %v1423 = vadd.f32 %v1420, 1.0
    %v1424 = vrcp.pop %v1421
    %v1425 = vmul.f32 1.0, %v1424
    %v1426 = vrcp.pop %v1422
    %v1427 = vmul.f32 1.0, %v1426
    %v1428 = vrcp.pop %v1423
    %v1429 = vmul.f32 1.0, %v1428
    %v1430 = vtanh.pop %v1411
    %v1431 = vmul.f32 %v1427, %v1318
    %v1432 = vmul.f32 %v1425, %v1430
    %v1433 = vadd.f32 %v1431, %v1432
    %v1434 = vtanh.pop %v1433
    %v1435 = vmul.f32 %v1429, %v1434
    %1436 = vst [vmem:[#allocation9] sm:$0xff] %v1435
    %1437 = vst [vmem:[#allocation11] sm:$0xff] %v1433
    %v1438 = vld [vmem:[#allocation6] sm:$0xf]
    %v1439 = vld [vmem:[#allocation6 + $0x8] sm:$0xf]
    %v1440 = vld [vmem:[#allocation6 + $0x10] sm:$0xf]
    %v1441 = vld [vmem:[#allocation6 + $0x18] sm:$0xf]
    %v1442 = vld [vmem:[#allocation6 + $0x20] sm:$0xf]
    %v1443 = vld [vmem:[#allocation6 + $0x28] sm:$0xf]
    %v1444 = vld [vmem:[#allocation6 + $0x30] sm:$0xf]
    %v1445 = vld [vmem:[#allocation6 + $0x38] sm:$0xf]
    %v1446 = vld [vmem:[#allocation6 + $0x40] sm:$0xf]
    %v1447 = vld [vmem:[#allocation6 + $0x48] sm:$0xf]
    %v1448 = vld [vmem:[#allocation6 + $0x50] sm:$0xf]
    %v1449 = vld [vmem:[#allocation6 + $0x58] sm:$0xf]
    %v1450 = vld [vmem:[#allocation6 + $0x60] sm:$0xf]
    %v1451 = vld [vmem:[#allocation6 + $0x68] sm:$0xf]
    %v1452 = vld [vmem:[#allocation6 + $0x70] sm:$0xf]
    %v1453 = vld [vmem:[#allocation6 + $0x78] sm:$0xf]
    %v1454 = vld [vmem:[#allocation6 + $0x4] sm:$0xf]
    %v1455 = vld [vmem:[#allocation6 + $0xc] sm:$0xf]
    %v1456 = vld [vmem:[#allocation6 + $0x14] sm:$0xf]
    %v1457 = vld [vmem:[#allocation6 + $0x1c] sm:$0xf]
    %v1458 = vld [vmem:[#allocation6 + $0x24] sm:$0xf]
    %v1459 = vld [vmem:[#allocation6 + $0x2c] sm:$0xf]
    %v1460 = vld [vmem:[#allocation6 + $0x34] sm:$0xf]
    %v1461 = vld [vmem:[#allocation6 + $0x3c] sm:$0xf]
    %v1462 = vld [vmem:[#allocation6 + $0x44] sm:$0xf]
    %v1463 = vld [vmem:[#allocation6 + $0x4c] sm:$0xf]
    %v1464 = vld [vmem:[#allocation6 + $0x54] sm:$0xf]
    %v1465 = vld [vmem:[#allocation6 + $0x5c] sm:$0xf]
    %v1466 = vld [vmem:[#allocation6 + $0x64] sm:$0xf]
    %v1467 = vld [vmem:[#allocation6 + $0x6c] sm:$0xf]
    %v1468 = vld [vmem:[#allocation6 + $0x74] sm:$0xf]
    %v1469 = vld [vmem:[#allocation6 + $0x7c] sm:$0xf]
    %v1470 = vld [vmem:[%s5 + $0x4] sm:$0x1]
    %v1471 = vld [vmem:[%s5 + $0x5] sm:$0x1]
    %v1472 = vpack.c.bf16 %v1435, %v1435
    %v1474 = vlaneseq
    %v1475 = vshrl.u32 %v1474, 7
    %v1476 = vsub.s32 0, %v1475
    %v1477 = vrot.slane %v1470, %v1476
    %v1495 = vunpack.c.l.b16 %v1438
    %v1496 = vunpack.c.l.b16 %v1439
    %v1497 = vunpack.c.l.b16 %v1440
    %v1498 = vunpack.c.l.b16 %v1441
    %v1499 = vunpack.c.l.b16 %v1442
    %v1500 = vunpack.c.l.b16 %v1443
    %v1501 = vunpack.c.l.b16 %v1444
    %v1502 = vunpack.c.l.b16 %v1445
    %v1503 = vunpack.c.l.b16 %v1446
    %v1504 = vunpack.c.l.b16 %v1447
    %v1505 = vunpack.c.l.b16 %v1448
    %v1506 = vunpack.c.l.b16 %v1449
    %v1507 = vunpack.c.l.b16 %v1450
    %v1508 = vunpack.c.l.b16 %v1451
    %v1509 = vunpack.c.l.b16 %v1452
    %v1510 = vunpack.c.l.b16 %v1453
    %v1511 = vpack.c.b16 %v1496, %v1495
    %v1512 = vpack.c.b16 %v1498, %v1497
    %v1513 = vpack.c.b16 %v1500, %v1499
    %v1514 = vpack.c.b16 %v1502, %v1501
    %v1515 = vpack.c.b16 %v1504, %v1503
    %v1516 = vpack.c.b16 %v1506, %v1505
    %v1517 = vpack.c.b16 %v1508, %v1507
    %v1518 = vpack.c.b16 %v1510, %v1509
    %1527 = vmatprep.subr.bf16.mxu0 0
    %1528 = vmatpush1.bf16.msra.mxu0 %v1511
    %1529 = vmatprep.subr.bf16.mxu0 0
    %1530 = vmatpush1.bf16.msra.mxu0 %v1512
    %1531 = vmatprep.subr.bf16.mxu0 0
    %1532 = vmatpush1.bf16.msra.mxu0 %v1513
    %1533 = vmatprep.subr.bf16.mxu0 0
    %1534 = vmatpush1.bf16.msra.mxu0 %v1514
    %1535 = vmatprep.subr.bf16.mxu0 0
    %1536 = vmatpush1.bf16.msra.mxu0 %v1515
    %1537 = vmatprep.subr.bf16.mxu0 0
    %1538 = vmatpush1.bf16.msra.mxu0 %v1516
    %1539 = vmatprep.subr.bf16.mxu0 0
    %1540 = vmatpush1.bf16.msra.mxu0 %v1517
    %1541 = vmatprep.subr.bf16.mxu0 0
    %1542 = vmatpush1.bf16.msra.mxu0 %v1518
    %1543 = vmatprep.subr.bf16.mxu0 0
    %1544 = vmatpush1.bf16.msra.mxu0 0
    %1545 = vmatprep.subr.bf16.mxu0 0
    %1546 = vmatpush1.bf16.msra.mxu0 0
    %1547 = vmatprep.subr.bf16.mxu0 0
    %1548 = vmatpush1.bf16.msra.mxu0 0
    %1549 = vmatprep.subr.bf16.mxu0 0
    %1550 = vmatpush1.bf16.msra.mxu0 0
    %1551 = vmatprep.subr.bf16.mxu0 0
    %1552 = vmatpush1.bf16.msra.mxu0 0
    %1553 = vmatprep.subr.bf16.mxu0 0
    %1554 = vmatpush1.bf16.msra.mxu0 0
    %1555 = vmatprep.subr.bf16.mxu0 0
    %1556 = vmatpush1.bf16.msra.mxu0 0
    %1557 = vmatprep.subr.bf16.mxu0 0
    %1558 = vmatpush1.bf16.msra.mxu0 0
    %1559 = vmatprep.mubr.bf16.mxu0 0
    %1560 = vmatmul.mubr.bf16.gmra.mrb[0].mxu0 %v1472
    %v1561 = vpop.f32.mrb[0].mxu0
    %v1562 = vadd.f32 %v1477, %v1561
    %v1563 = vpop.f32.mrb[0].mxu0
    %v1564 = vpop.f32.mrb[0].mxu0
    %v1565 = vpop.f32.mrb[0].mxu0
    %1566 = vdwg.mxu0
    %v1567 = vmax.f32 %v1562, 0.0
    %v1568 = vpack.c.bf16 %v1567, %v1567
    %v1570 = vlaneseq
    %v1571 = vshrl.u32 %v1570, 7
    %v1572 = vsub.s32 0, %v1571
    %v1573 = vrot.slane %v1471, %v1572
    %v1591 = vunpack.c.l.b16 %v1454
    %v1592 = vunpack.c.l.b16 %v1455
    %v1593 = vunpack.c.l.b16 %v1456
    %v1594 = vunpack.c.l.b16 %v1457
    %v1595 = vunpack.c.l.b16 %v1458
    %v1596 = vunpack.c.l.b16 %v1459
    %v1597 = vunpack.c.l.b16 %v1460
    %v1598 = vunpack.c.l.b16 %v1461
    %v1599 = vunpack.c.l.b16 %v1462
    %v1600 = vunpack.c.l.b16 %v1463
    %v1601 = vunpack.c.l.b16 %v1464
    %v1602 = vunpack.c.l.b16 %v1465
    %v1603 = vunpack.c.l.b16 %v1466
    %v1604 = vunpack.c.l.b16 %v1467
    %v1605 = vunpack.c.l.b16 %v1468
    %v1606 = vunpack.c.l.b16 %v1469
    %v1607 = vpack.c.b16 %v1592, %v1591
    %v1608 = vpack.c.b16 %v1594, %v1593
    %v1609 = vpack.c.b16 %v1596, %v1595
    %v1610 = vpack.c.b16 %v1598, %v1597
    %v1611 = vpack.c.b16 %v1600, %v1599
    %v1612 = vpack.c.b16 %v1602, %v1601
    %v1613 = vpack.c.b16 %v1604, %v1603
    %v1614 = vpack.c.b16 %v1606, %v1605
    %1623 = vmatprep.subr.bf16.mxu0 0
    %1624 = vmatpush1.bf16.msra.mxu0 %v1607
    %1625 = vmatprep.subr.bf16.mxu0 0
    %1626 = vmatpush1.bf16.msra.mxu0 %v1608
    %1627 = vmatprep.subr.bf16.mxu0 0
    %1628 = vmatpush1.bf16.msra.mxu0 %v1609
    %1629 = vmatprep.subr.bf16.mxu0 0
    %1630 = vmatpush1.bf16.msra.mxu0 %v1610
    %1631 = vmatprep.subr.bf16.mxu0 0
    %1632 = vmatpush1.bf16.msra.mxu0 %v1611
    %1633 = vmatprep.subr.bf16.mxu0 0
    %1634 = vmatpush1.bf16.msra.mxu0 %v1612
    %1635 = vmatprep.subr.bf16.mxu0 0
    %1636 = vmatpush1.bf16.msra.mxu0 %v1613
    %1637 = vmatprep.subr.bf16.mxu0 0
    %1638 = vmatpush1.bf16.msra.mxu0 %v1614
    %1639 = vmatprep.subr.bf16.mxu0 0
    %1640 = vmatpush1.bf16.msra.mxu0 0
    %1641 = vmatprep.subr.bf16.mxu0 0
    %1642 = vmatpush1.bf16.msra.mxu0 0
    %1643 = vmatprep.subr.bf16.mxu0 0
    %1644 = vmatpush1.bf16.msra.mxu0 0
    %1645 = vmatprep.subr.bf16.mxu0 0
    %1646 = vmatpush1.bf16.msra.mxu0 0
    %1647 = vmatprep.subr.bf16.mxu0 0
    %1648 = vmatpush1.bf16.msra.mxu0 0
    %1649 = vmatprep.subr.bf16.mxu0 0
    %1650 = vmatpush1.bf16.msra.mxu0 0
    %1651 = vmatprep.subr.bf16.mxu0 0
    %1652 = vmatpush1.bf16.msra.mxu0 0
    %1653 = vmatprep.subr.bf16.mxu0 0
    %1654 = vmatpush1.bf16.msra.mxu0 0
    %1655 = vmatprep.mubr.bf16.mxu0 0
    %1656 = vmatmul.mubr.bf16.gmra.mrb[0].mxu0 %v1568
    %v1657 = vpop.f32.mrb[0].mxu0
    %v1658 = vadd.f32 %v1573, %v1657
    %v1659 = vpop.f32.mrb[0].mxu0
    %v1660 = vpop.f32.mrb[0].mxu0
    %v1661 = vpop.f32.mrb[0].mxu0
    %1662 = vdwg.mxu0
    %1663 = vst [vmem:[#allocation8] sm:$0xff] %v1658
    // Predicated region
    $region34: #{tpu_custom_call.1} parent=1 // pred_check
      _
    $region35: #{tpu_custom_call.1} parent=1 // pred_check_branch
      %1665 = sbr.rel (0) target = $region37
    $region36: #{tpu_custom_call.1} parent=1 // pred_region
      %s1667 = ssub.s32 128, 128
      %1668 = vsyncadd [#allocation5], %s1667
      %s1670 = sshll.u32 [#allocation8], 4
      %s1671 = int_to_ptr.vmem [resolvable:$true] %s1670
      %1673 = dma.vmem_to_hbm [thread:$0]  %s1671, 128, %s6, [#allocation5]
    $region37: #{tpu_custom_call.1} parent=1 // pred_fallthru
      _
    // Predicated region
    $region38: #{tpu_custom_call.1} parent=1 // pred_check
      _
    $region39: #{tpu_custom_call.1} parent=1 // pred_check_branch
      %1675 = sbr.rel (0) target = $region41
    $region40: #{tpu_custom_call.1} parent=1 // pred_region
      %s1677 = ssub.s32 128, 128
      %1678 = vsyncadd [#allocation10], %s1677
      %s1680 = sshll.u32 [#allocation9], 4
      %s1681 = int_to_ptr.vmem [resolvable:$true] %s1680
      %1683 = dma.vmem_to_hbm [thread:$0]  %s1681, 128, %s7, [#allocation10]
    $region41: #{tpu_custom_call.1} parent=1 // pred_fallthru
      _
    // Predicated region
    $region42: #{tpu_custom_call.1} parent=1 // pred_check
      _
    $region43: #{tpu_custom_call.1} parent=1 // pred_check_branch
      %1685 = sbr.rel (0) target = $region45
    $region44: #{tpu_custom_call.1} parent=1 // pred_region
      %s1687 = ssub.s32 128, 128
      %1688 = vsyncadd [#allocation10], %s1687
      %s1690 = sshll.u32 [#allocation11], 4
      %s1691 = int_to_ptr.vmem [resolvable:$true] %s1690
      %1693 = dma.vmem_to_hbm [thread:$0]  %s1691, 128, %s8, [#allocation10]
    $region45: #{tpu_custom_call.1} parent=1 // pred_fallthru
      _
    // Predicated region
    $region46: #{tpu_custom_call.1} parent=1 // pred_check
      _
    $region47: #{tpu_custom_call.1} parent=1 // pred_check_branch
      %1695 = sbr.rel (0) target = $region49
    $region48: #{tpu_custom_call.1} parent=1 // pred_region
      %1696 = dma.done [#allocation5], 128
    $region49: #{tpu_custom_call.1} parent=1 // pred_fallthru
      _
    // Predicated region
    $region50: #{tpu_custom_call.1} parent=1 // pred_check
      _
    $region51: #{tpu_custom_call.1} parent=1 // pred_check_branch
      %1698 = sbr.rel (0) target = $region53
    $region52: #{tpu_custom_call.1} parent=1 // pred_region
      %1699 = dma.done [#allocation10], 128
    $region53: #{tpu_custom_call.1} parent=1 // pred_fallthru
      _
    // Predicated region
    $region54: #{tpu_custom_call.1} parent=1 // pred_check
      _
    $region55: #{tpu_custom_call.1} parent=1 // pred_check_branch
      %1701 = sbr.rel (0) target = $region57
    $region56: #{tpu_custom_call.1} parent=1 // pred_region
      %1702 = dma.done [#allocation10], 128
    $region57: #{tpu_custom_call.1} parent=1 // pred_fallthru
      _
    %1703 = vsyncpa [#allocation4], 1
    %1704 = vsyncpa [#allocation7], 1
    %1705 = vsyncpa [#allocation5], 1
    %1706 = vsyncpa [#allocation10], 1

</llo_original>
